<compile_context>
chip_gen: v5e
topology: v5e:2x2
jax: 0.10.0
libtpu: 0.0.40
codegen_flags: <defaults>
</compile_context>

<pallas_src>
import jax
import jax.numpy as jnp
from jax import lax
from jax.experimental import pallas as pl
from jax.experimental.pallas import tpu as pltpu


# ----------------------------- kernel -------------------------------------- #

def _tree_sum(vals):
    vals = list(vals)
    while len(vals) > 1:
        nxt = []
        for i in range(0, len(vals) - 1, 2):
            nxt.append(vals[i] + vals[i + 1])
        if len(vals) % 2:
            nxt.append(vals[-1])
        vals = nxt
    return vals[0]


def _make_attention_kernel(C, C8, H, W, PAD, conv_dtype):
    HW = H * W

    def kernel(x_ref, w1t_ref, b1_ref, w2_ref, b2_ref, w49_ref, bsp_ref,
               o_ref, wide_ref):
        # x_ref: (C, HW) fp32 for the current batch element (leading dim squeezed)
        x = x_ref[...]

        # ---- channel attention: GAP -> 1x1 conv -> ReLU -> 1x1 conv -> sigmoid
        gap = jnp.mean(x, axis=1, keepdims=True)                        # (C, 1)
        # 1x1 convs as VPU broadcast-multiply + reduce (tiny; no MXU GEMV).
        h = jnp.sum(w1t_ref[...] * gap, axis=0, keepdims=True) + b1_ref[...]   # (1, C8)
        h = jnp.maximum(h, 0.0)
        ca = jax.nn.sigmoid(
            jnp.sum(w2_ref[...] * h, axis=1, keepdims=True) + b2_ref[...])     # (C, 1)
        x_ca = x * ca                                                   # (C, HW) f32

        # ---- spatial attention: 7x7 same-padded conv over x_ca ----
        # Step 1: contract channels on the MXU (bf16 operands, f32 accumulation)
        # -> one spatial map per (di, dj) tap.
        m = jnp.dot(w49_ref[...], x_ca.astype(conv_dtype),
                    preferred_element_type=jnp.float32)                 # (49, HW)

        # Step 2: lane-padded scratch so every tap shift is a static, in-bounds
        # slice; row overflow reads the zero padding.  PAD is a multiple of 128
        # and HW is a multiple of 128 here, so all three stores are unmasked,
        # lane-aligned vst.  Pads are re-zeroed each grid step on purpose: with
        # a megacore-parallel grid each core has its own scratch, so a
        # program_id==0 guard would not be safe.
        zeros_pad = jnp.zeros((49, PAD), jnp.float32)
        wide_ref[:, :PAD] = zeros_pad
        wide_ref[:, PAD + HW:] = zeros_pad
        wide_ref[:, PAD:PAD + HW] = m

        # Step 3: 49 shifted adds, restructured:
        #   * 7 independent per-dj partial sums (row overflow already lands in
        #     the zero padding, so the di accumulation needs no mask),
        #   * one column-wrap select per dj (mask depends only on dj),
        #   * tree reductions to break the serial dependence chain.
        w_idx = lax.broadcasted_iota(jnp.int32, (1, HW), 1) % W
        dj_parts = []
        for dj in range(7):
            col = w_idx + (dj - 3)
            mask = jnp.logical_and(col >= 0, col < W)
            rows = []
            for di in range(7):
                k = di * 7 + dj
                start = PAD + (di - 3) * W + (dj - 3)
                rows.append(wide_ref[k:k + 1, start:start + HW])        # (1, HW)
            dj_parts.append(jnp.where(mask, _tree_sum(rows), 0.0))
        acc = _tree_sum(dj_parts)                                       # (1, HW)

        sattn = jax.nn.sigmoid(acc + bsp_ref[0])                        # (1, HW)
        o_ref[...] = x_ca * sattn                                       # (C, HW)

    return kernel


# ----------------------------- wrapper ------------------------------------- #

def attention_module(x, params, conv_dtype=jnp.bfloat16):
    """x: (N, C, H, W) float32.  Returns (N, C, H, W) float32.

    conv_dtype: operand dtype of the MXU channel-contraction matmul
    (bf16 = native MXU path, recommended; f32 = exact path).
    """
    w1, b1, w2, b2, wsp, bsp = (params[k] for k in
                                ("w1", "b1", "w2", "b2", "wsp", "bsp"))
    N, C, H, W = x.shape
    HW = H * W
    C8 = w1.shape[0]
    # Lane-aligned padding, large enough for all 49 static shifts (>= 3W+3).
    PAD = ((3 * W + 3 + 127) // 128) * 128

    x_flat = x.reshape(N, C, HW).astype(jnp.float32)
    w1t = jnp.transpose(w1).astype(jnp.float32)           # (C, C8)
    b1r = b1.reshape(1, C8).astype(jnp.float32)
    b2c = b2.reshape(C, 1).astype(jnp.float32)
    w2f = w2.astype(jnp.float32)                           # (C, C8)
    # w49[di*7+dj, c] = wsp[0, c, di, dj]; cast to the MXU operand dtype.
    w49 = jnp.transpose(wsp[0], (1, 2, 0)).reshape(49, C).astype(conv_dtype)
    bsp1 = bsp.reshape(1).astype(jnp.float32)

    kernel = _make_attention_kernel(C, C8, H, W, PAD, conv_dtype)

    # Explicit VMEM budget: double-buffered in/out blocks + wide scratch +
    # weights + margin.  Never below the 32 MiB default, capped at 64 MiB so
    # it is valid on v7x's smaller physical VMEM as well.
    io_bytes = 2 * 2 * C * HW * 4
    scratch_bytes = 49 * (HW + 2 * PAD) * 4
    vmem_limit = int(min(64 * 1024 * 1024,
                         max(32 * 1024 * 1024,
                             io_bytes + 2 * scratch_bytes + (4 << 20))))

    y = pl.pallas_call(
        kernel,
        out_shape=jax.ShapeDtypeStruct((N, C, HW), jnp.float32),
        grid=(N,),
        in_specs=[
            pl.BlockSpec((None, C, HW), lambda n: (n, 0, 0)),          # x (squeezed N)
            pl.BlockSpec((C, C8), lambda n: (0, 0)),                   # w1^T
            pl.BlockSpec((1, C8), lambda n: (0, 0)),                   # b1
            pl.BlockSpec((C, C8), lambda n: (0, 0)),                   # w2
            pl.BlockSpec((C, 1), lambda n: (0, 0)),                    # b2
            pl.BlockSpec((49, C), lambda n: (0, 0)),                   # spatial weights
            pl.BlockSpec(memory_space=pltpu.MemorySpace.SMEM),         # bsp scalar
        ],
        out_specs=pl.BlockSpec((None, C, HW), lambda n: (n, 0, 0)),
        scratch_shapes=[pltpu.VMEM((49, HW + 2 * PAD), jnp.float32)],
        compiler_params=pltpu.CompilerParams(
            dimension_semantics=("parallel",),
            vmem_limit_bytes=vmem_limit),
    )(x_flat, w1t, b1r, w2f, b2c, w49, bsp1)

    return y.reshape(N, C, H, W)


# -------------------------- params & references ----------------------------- #

def init_params(key, C):
    C8 = C // 8
    ks = jax.random.split(key, 6)
    s = 0.1
    return dict(
        w1=jax.random.normal(ks[0], (C8, C), jnp.float32) * s,        # Conv2d(C, C//8, 1)
        b1=jax.random.normal(ks[1], (C8,), jnp.float32) * s,
        w2=jax.random.normal(ks[2], (C, C8), jnp.float32) * s,        # Conv2d(C//8, C, 1)
        b2=jax.random.normal(ks[3], (C,), jnp.float32) * s,
        wsp=jax.random.normal(ks[4], (1, C, 7, 7), jnp.float32) * s,  # Conv2d(C, 1, 7, pad=3)
        bsp=jax.random.normal(ks[5], (1,), jnp.float32) * s,
    )


def _channel_attention_ref(x, p):
    gap = jnp.mean(x, axis=(2, 3), keepdims=True)                      # (N,C,1,1)
    h = jnp.einsum('oc,ncij->noij', p["w1"], gap) + p["b1"].reshape(1, -1, 1, 1)
    h = jnp.maximum(h, 0.0)
    a = jax.nn.sigmoid(jnp.einsum('oc,ncij->noij', p["w2"], h)
                       + p["b2"].reshape(1, -1, 1, 1))
    return x * a


def ref_forward(x, p):
    x_ca = _channel_attention_ref(x, p)
    sp = lax.conv_general_dilated(x_ca, p["wsp"], (1, 1), ((3, 3), (3, 3)),
                                  dimension_numbers=('NCHW', 'OIHW', 'NCHW'))
    sattn = jax.nn.sigmoid(sp + p["bsp"].reshape(1, 1, 1, 1))
    return x_ca * sattn


def ref_forward_bf16conv(x, p):
    # Same math, but the 7x7 conv operands are rounded to bf16 (f32 accumulate)
    # to match the kernel's MXU path bit-for-bit up to summation order.
    x_ca = _channel_attention_ref(x, p)
    sp = lax.conv_general_dilated(x_ca.astype(jnp.bfloat16),
                                  p["wsp"].astype(jnp.bfloat16),
                                  (1, 1), ((3, 3), (3, 3)),
                                  dimension_numbers=('NCHW', 'OIHW', 'NCHW'),
                                  preferred_element_type=jnp.float32)
    sattn = jax.nn.sigmoid(sp + p["bsp"].reshape(1, 1, 1, 1))
    return x_ca * sattn


# ------------------------------- main -------------------------------------- #

if __name__ == "__main__":
    key = jax.random.PRNGKey(0)
    kx, kp = jax.random.split(key)
    N, C, H, W = 2, 16, 16, 16          # in_channels must be >= 8 (C // 8 >= 1)
    x = jax.random.normal(kx, (N, C, H, W), jnp.float32)
    params = init_params(kp, C)

    y_ref = ref_forward(x, params)

    # 1) Exact path (f32 matmul): strict structural-correctness check.
    y_f32 = attention_module(x, params, conv_dtype=jnp.float32)
    jax.block_until_ready(y_f32)
    assert y_f32.shape == (N, C, H, W) and y_f32.dtype == jnp.float32
    err_f32 = float(jnp.max(jnp.abs(y_f32 - y_ref)))
    assert err_f32 < 2e-3, f"f32 path mismatch vs reference: max abs err = {err_f32}"

    # 2) Recommended fast path (bf16 MXU operands, f32 accumulation).
    y_bf16 = attention_module(x, params, conv_dtype=jnp.bfloat16)
    jax.block_until_ready(y_bf16)
    assert y_bf16.shape == (N, C, H, W) and y_bf16.dtype == jnp.float32
    # Structural check against a reference with identically-quantized conv inputs.
    err_matched = float(jnp.max(jnp.abs(y_bf16 - ref_forward_bf16conv(x, params))))
    assert err_matched < 2e-3, f"bf16 path mismatch vs matched reference: {err_matched}"
    # Quantization error bound against the pure-f32 reference.
    err_quant = float(jnp.max(jnp.abs(y_bf16 - y_ref)))
    assert err_quant < 2e-2, f"bf16 quantization error too large: {err_quant}"

    print("KERNEL_OK")
</pallas_src>

<mosaic_0001>
module attributes {stable_mosaic.version = 11 : i64} {
  func.func @kernel(%arg0: i32, %arg1: memref<1x16x256xf32, #tpu.memory_space<vmem>>, %arg2: memref<16x2xf32, #tpu.memory_space<vmem>>, %arg3: memref<1x2xf32, #tpu.memory_space<vmem>>, %arg4: memref<16x2xf32, #tpu.memory_space<vmem>>, %arg5: memref<16x1xf32, #tpu.memory_space<vmem>>, %arg6: memref<49x16xf32, #tpu.memory_space<vmem>>, %arg7: memref<1xf32, #tpu.memory_space<smem>>, %arg8: memref<1x16x256xf32, #tpu.memory_space<vmem>>, %arg9: memref<49x512xf32, #tpu.memory_space<vmem>>) attributes {dimension_semantics = [#tpu.dimension_semantics<parallel>], iteration_bounds = array<i64: 2>, scalar_prefetch = 0 : i64, scratch_operands = 1 : i64, tpu.core_type = #tpu.core_type<tc>, window_params = [{transform_indices = @transform_0, window_bounds = array<i64: 1, 16, 256>}, {pipeline_mode = #tpu.pipeline_mode<synchronous>, transform_indices = @transform_1, window_bounds = array<i64: 16, 2>}, {pipeline_mode = #tpu.pipeline_mode<synchronous>, transform_indices = @transform_2, window_bounds = array<i64: 1, 2>}, {pipeline_mode = #tpu.pipeline_mode<synchronous>, transform_indices = @transform_3, window_bounds = array<i64: 16, 2>}, {pipeline_mode = #tpu.pipeline_mode<synchronous>, transform_indices = @transform_4, window_bounds = array<i64: 16, 1>}, {pipeline_mode = #tpu.pipeline_mode<synchronous>, transform_indices = @transform_5, window_bounds = array<i64: 49, 16>}, {transform_indices = @transform_6, window_bounds = array<i64: 1>}, {transform_indices = @transform_7, window_bounds = array<i64: 1, 16, 256>}]} {
    %c0 = arith.constant 0 : index
    %c0_0 = arith.constant 0 : index
    %c0_1 = arith.constant 0 : index
    %0 = vector.load %arg1[%c0, %c0_0, %c0_1] : memref<1x16x256xf32, #tpu.memory_space<vmem>>, vector<1x16x256xf32>
    %1 = vector.shape_cast %0 : vector<1x16x256xf32> to vector<16x256xf32>
    %cst = arith.constant dense<0.000000e+00> : vector<16xf32>
    %2 = vector.multi_reduction <add>, %1, %cst [1] : vector<16x256xf32> to vector<16xf32>
    %3 = vector.shape_cast %2 : vector<16xf32> to vector<16x1xf32>
    %cst_2 = arith.constant 2.560000e+02 : f32
    %4 = vector.broadcast %cst_2 : f32 to vector<16x1xf32>
    %5 = arith.divf %3, %4 : vector<16x1xf32>
    %c0_3 = arith.constant 0 : index
    %c0_4 = arith.constant 0 : index
    %6 = vector.load %arg2[%c0_3, %c0_4] : memref<16x2xf32, #tpu.memory_space<vmem>>, vector<16x2xf32>
    %7 = vector.broadcast %5 : vector<16x1xf32> to vector<16x2xf32>
    %8 = arith.mulf %6, %7 : vector<16x2xf32>
    %cst_5 = arith.constant dense<0.000000e+00> : vector<2xf32>
    %9 = vector.multi_reduction <add>, %8, %cst_5 [0] : vector<16x2xf32> to vector<2xf32>
    %10 = vector.shape_cast %9 : vector<2xf32> to vector<1x2xf32>
    %c0_6 = arith.constant 0 : index
    %c0_7 = arith.constant 0 : index
    %11 = vector.load %arg3[%c0_6, %c0_7] : memref<1x2xf32, #tpu.memory_space<vmem>>, vector<1x2xf32>
    %12 = arith.addf %10, %11 : vector<1x2xf32>
    %cst_8 = arith.constant 0.000000e+00 : f32
    %13 = vector.broadcast %cst_8 : f32 to vector<1x2xf32>
    %14 = arith.maximumf %12, %13 : vector<1x2xf32>
    %c0_9 = arith.constant 0 : index
    %c0_10 = arith.constant 0 : index
    %15 = vector.load %arg4[%c0_9, %c0_10] : memref<16x2xf32, #tpu.memory_space<vmem>>, vector<16x2xf32>
    %16 = vector.broadcast %14 : vector<1x2xf32> to vector<16x2xf32>
    %17 = arith.mulf %15, %16 : vector<16x2xf32>
    %cst_11 = arith.constant dense<0.000000e+00> : vector<16xf32>
    %18 = vector.multi_reduction <add>, %17, %cst_11 [1] : vector<16x2xf32> to vector<16xf32>
    %19 = vector.shape_cast %18 : vector<16xf32> to vector<16x1xf32>
    %c0_12 = arith.constant 0 : index
    %c0_13 = arith.constant 0 : index
    %20 = vector.load %arg5[%c0_12, %c0_13] : memref<16x1xf32, #tpu.memory_space<vmem>>, vector<16x1xf32>
    %21 = arith.addf %19, %20 : vector<16x1xf32>
    %22 = arith.negf %21 : vector<16x1xf32>
    %23 = math.exp %22 : vector<16x1xf32>
    %cst_14 = arith.constant 1.000000e+00 : f32
    %24 = vector.broadcast %cst_14 : f32 to vector<16x1xf32>
    %25 = arith.addf %24, %23 : vector<16x1xf32>
    %26 = arith.divf %24, %25 : vector<16x1xf32>
    %27 = vector.broadcast %26 : vector<16x1xf32> to vector<16x256xf32>
    %28 = arith.mulf %1, %27 : vector<16x256xf32>
    %c0_15 = arith.constant 0 : index
    %c0_16 = arith.constant 0 : index
    %29 = vector.load %arg6[%c0_15, %c0_16] : memref<49x16xf32, #tpu.memory_space<vmem>>, vector<49x16xf32>
    %cst_17 = arith.constant dense<0.000000e+00> : vector<49x256xf32>
    %30 = tpu.matmul %29, %28, %cst_17 {dimension_numbers = #tpu.dot_dimension_numbers<[1], [0], [0], [1], [0, 0, 1, 1], [], []>} : vector<49x16xf32>, vector<16x256xf32>, vector<49x256xf32> -> vector<49x256xf32>
    %cst_18 = arith.constant 0.000000e+00 : f32
    %31 = vector.broadcast %cst_18 : f32 to vector<49x128xf32>
    %c0_19 = arith.constant 0 : index
    %c0_20 = arith.constant 0 : index
    %32 = vector.load %arg9[%c0_19, %c0_20] : memref<49x512xf32, #tpu.memory_space<vmem>>, vector<49x128xf32>
    tpu.vector_store %arg9[%c0_19, %c0_20], %31 {strides = array<i32>} : memref<49x512xf32, #tpu.memory_space<vmem>>, vector<49x128xf32>,
    %c0_21 = arith.constant 0 : index
    %c384 = arith.constant 384 : index
    %33 = vector.load %arg9[%c0_21, %c384] : memref<49x512xf32, #tpu.memory_space<vmem>>, vector<49x128xf32>
    tpu.vector_store %arg9[%c0_21, %c384], %31 {strides = array<i32>} : memref<49x512xf32, #tpu.memory_space<vmem>>, vector<49x128xf32>,
    %c0_22 = arith.constant 0 : index
    %c128 = arith.constant 128 : index
    %34 = vector.load %arg9[%c0_22, %c128] : memref<49x512xf32, #tpu.memory_space<vmem>>, vector<49x256xf32>
    tpu.vector_store %arg9[%c0_22, %c128], %30 {strides = array<i32>} : memref<49x512xf32, #tpu.memory_space<vmem>>, vector<49x256xf32>,
    %35 = tpu.iota {dimensions = array<i32: 1>} : vector<1x256xi32>
    %c16_i32 = arith.constant 16 : i32
    %c0_i32 = arith.constant 0 : i32
    %36 = arith.cmpi eq, %c16_i32, %c0_i32 : i32
    %c1_i32 = arith.constant 1 : i32
    %37 = arith.select %36, %c1_i32, %c16_i32 : i32
    %38 = vector.broadcast %37 : i32 to vector<1x256xi32>
    %39 = arith.remsi %35, %38 : vector<1x256xi32>
    %c0_i32_23 = arith.constant 0 : i32
    %40 = vector.broadcast %c0_i32_23 : i32 to vector<1x256xi32>
    %41 = arith.cmpi ne, %39, %40 : vector<1x256xi32>
    %c0_i32_24 = arith.constant 0 : i32
    %42 = vector.broadcast %c0_i32_24 : i32 to vector<1x256xi32>
    %43 = arith.cmpi slt, %39, %42 : vector<1x256xi32>
    %c0_i32_25 = arith.constant 0 : i32
    %44 = arith.cmpi slt, %37, %c0_i32_25 : i32
    %45 = vector.broadcast %44 : i1 to vector<1x256xi1>
    %46 = vector.broadcast %45 : vector<1x256xi1> to vector<1x256xi1>
    %47 = arith.xori %43, %46 : vector<1x256xi1>
    %48 = arith.andi %47, %41 : vector<1x256xi1>
    %49 = vector.broadcast %37 : i32 to vector<1x256xi32>
    %50 = arith.addi %39, %49 : vector<1x256xi32>
    %51 = arith.select %48, %50, %39 : vector<1x256xi1>, vector<1x256xi32>
    %c-3_i32 = arith.constant -3 : i32
    %52 = vector.broadcast %c-3_i32 : i32 to vector<1x256xi32>
    %53 = arith.addi %51, %52 : vector<1x256xi32>
    %c0_i32_26 = arith.constant 0 : i32
    %54 = vector.broadcast %c0_i32_26 : i32 to vector<1x256xi32>
    %55 = arith.cmpi sge, %53, %54 : vector<1x256xi32>
    %c16_i32_27 = arith.constant 16 : i32
    %56 = vector.broadcast %c16_i32_27 : i32 to vector<1x256xi32>
    %57 = arith.cmpi slt, %53, %56 : vector<1x256xi32>
    %58 = arith.andi %55, %57 : vector<1x256xi1>
    %c0_28 = arith.constant 0 : index
    %c77 = arith.constant 77 : index
    %59 = vector.load %arg9[%c0_28, %c77] : memref<49x512xf32, #tpu.memory_space<vmem>>, vector<1x256xf32>
    %c7 = arith.constant 7 : index
    %c93 = arith.constant 93 : index
    %60 = vector.load %arg9[%c7, %c93] : memref<49x512xf32, #tpu.memory_space<vmem>>, vector<1x256xf32>
    %c14 = arith.constant 14 : index
    %c109 = arith.constant 109 : index
    %61 = vector.load %arg9[%c14, %c109] : memref<49x512xf32, #tpu.memory_space<vmem>>, vector<1x256xf32>
    %c21 = arith.constant 21 : index
    %c125 = arith.constant 125 : index
    %62 = vector.load %arg9[%c21, %c125] : memref<49x512xf32, #tpu.memory_space<vmem>>, vector<1x256xf32>
    %c28 = arith.constant 28 : index
    %c141 = arith.constant 141 : index
    %63 = vector.load %arg9[%c28, %c141] : memref<49x512xf32, #tpu.memory_space<vmem>>, vector<1x256xf32>
    %c35 = arith.constant 35 : index
    %c157 = arith.constant 157 : index
    %64 = vector.load %arg9[%c35, %c157] : memref<49x512xf32, #tpu.memory_space<vmem>>, vector<1x256xf32>
    %c42 = arith.constant 42 : index
    %c173 = arith.constant 173 : index
    %65 = vector.load %arg9[%c42, %c173] : memref<49x512xf32, #tpu.memory_space<vmem>>, vector<1x256xf32>
    %66 = arith.addf %59, %60 : vector<1x256xf32>
    %67 = arith.addf %61, %62 : vector<1x256xf32>
    %68 = arith.addf %63, %64 : vector<1x256xf32>
    %69 = arith.addf %66, %67 : vector<1x256xf32>
    %70 = arith.addf %68, %65 : vector<1x256xf32>
    %71 = arith.addf %69, %70 : vector<1x256xf32>
    %cst_29 = arith.constant 0.000000e+00 : f32
    %72 = vector.broadcast %cst_29 : f32 to vector<1x256xf32>
    %73 = arith.select %58, %71, %72 : vector<1x256xi1>, vector<1x256xf32>
    %c-2_i32 = arith.constant -2 : i32
    %74 = vector.broadcast %c-2_i32 : i32 to vector<1x256xi32>
    %75 = arith.addi %51, %74 : vector<1x256xi32>
    %c0_i32_30 = arith.constant 0 : i32
    %76 = vector.broadcast %c0_i32_30 : i32 to vector<1x256xi32>
    %77 = arith.cmpi sge, %75, %76 : vector<1x256xi32>
    %c16_i32_31 = arith.constant 16 : i32
    %78 = vector.broadcast %c16_i32_31 : i32 to vector<1x256xi32>
    %79 = arith.cmpi slt, %75, %78 : vector<1x256xi32>
    %80 = arith.andi %77, %79 : vector<1x256xi1>
    %c1 = arith.constant 1 : index
    %c78 = arith.constant 78 : index
    %81 = vector.load %arg9[%c1, %c78] : memref<49x512xf32, #tpu.memory_space<vmem>>, vector<1x256xf32>
    %c8 = arith.constant 8 : index
    %c94 = arith.constant 94 : index
    %82 = vector.load %arg9[%c8, %c94] : memref<49x512xf32, #tpu.memory_space<vmem>>, vector<1x256xf32>
    %c15 = arith.constant 15 : index
    %c110 = arith.constant 110 : index
    %83 = vector.load %arg9[%c15, %c110] : memref<49x512xf32, #tpu.memory_space<vmem>>, vector<1x256xf32>
    %c22 = arith.constant 22 : index
    %c126 = arith.constant 126 : index
    %84 = vector.load %arg9[%c22, %c126] : memref<49x512xf32, #tpu.memory_space<vmem>>, vector<1x256xf32>
    %c29 = arith.constant 29 : index
    %c142 = arith.constant 142 : index
    %85 = vector.load %arg9[%c29, %c142] : memref<49x512xf32, #tpu.memory_space<vmem>>, vector<1x256xf32>
    %c36 = arith.constant 36 : index
    %c158 = arith.constant 158 : index
    %86 = vector.load %arg9[%c36, %c158] : memref<49x512xf32, #tpu.memory_space<vmem>>, vector<1x256xf32>
    %c43 = arith.constant 43 : index
    %c174 = arith.constant 174 : index
    %87 = vector.load %arg9[%c43, %c174] : memref<49x512xf32, #tpu.memory_space<vmem>>, vector<1x256xf32>
    %88 = arith.addf %81, %82 : vector<1x256xf32>
    %89 = arith.addf %83, %84 : vector<1x256xf32>
    %90 = arith.addf %85, %86 : vector<1x256xf32>
    %91 = arith.addf %88, %89 : vector<1x256xf32>
    %92 = arith.addf %90, %87 : vector<1x256xf32>
    %93 = arith.addf %91, %92 : vector<1x256xf32>
    %cst_32 = arith.constant 0.000000e+00 : f32
    %94 = vector.broadcast %cst_32 : f32 to vector<1x256xf32>
    %95 = arith.select %80, %93, %94 : vector<1x256xi1>, vector<1x256xf32>
    %c-1_i32 = arith.constant -1 : i32
    %96 = vector.broadcast %c-1_i32 : i32 to vector<1x256xi32>
    %97 = arith.addi %51, %96 : vector<1x256xi32>
    %c0_i32_33 = arith.constant 0 : i32
    %98 = vector.broadcast %c0_i32_33 : i32 to vector<1x256xi32>
    %99 = arith.cmpi sge, %97, %98 : vector<1x256xi32>
    %c16_i32_34 = arith.constant 16 : i32
    %100 = vector.broadcast %c16_i32_34 : i32 to vector<1x256xi32>
    %101 = arith.cmpi slt, %97, %100 : vector<1x256xi32>
    %102 = arith.andi %99, %101 : vector<1x256xi1>
    %c2 = arith.constant 2 : index
    %c79 = arith.constant 79 : index
    %103 = vector.load %arg9[%c2, %c79] : memref<49x512xf32, #tpu.memory_space<vmem>>, vector<1x256xf32>
    %c9 = arith.constant 9 : index
    %c95 = arith.constant 95 : index
    %104 = vector.load %arg9[%c9, %c95] : memref<49x512xf32, #tpu.memory_space<vmem>>, vector<1x256xf32>
    %c16 = arith.constant 16 : index
    %c111 = arith.constant 111 : index
    %105 = vector.load %arg9[%c16, %c111] : memref<49x512xf32, #tpu.memory_space<vmem>>, vector<1x256xf32>
    %c23 = arith.constant 23 : index
    %c127 = arith.constant 127 : index
    %106 = vector.load %arg9[%c23, %c127] : memref<49x512xf32, #tpu.memory_space<vmem>>, vector<1x256xf32>
    %c30 = arith.constant 30 : index
    %c143 = arith.constant 143 : index
    %107 = vector.load %arg9[%c30, %c143] : memref<49x512xf32, #tpu.memory_space<vmem>>, vector<1x256xf32>
    %c37 = arith.constant 37 : index
    %c159 = arith.constant 159 : index
    %108 = vector.load %arg9[%c37, %c159] : memref<49x512xf32, #tpu.memory_space<vmem>>, vector<1x256xf32>
    %c44 = arith.constant 44 : index
    %c175 = arith.constant 175 : index
    %109 = vector.load %arg9[%c44, %c175] : memref<49x512xf32, #tpu.memory_space<vmem>>, vector<1x256xf32>
    %110 = arith.addf %103, %104 : vector<1x256xf32>
    %111 = arith.addf %105, %106 : vector<1x256xf32>
    %112 = arith.addf %107, %108 : vector<1x256xf32>
    %113 = arith.addf %110, %111 : vector<1x256xf32>
    %114 = arith.addf %112, %109 : vector<1x256xf32>
    %115 = arith.addf %113, %114 : vector<1x256xf32>
    %cst_35 = arith.constant 0.000000e+00 : f32
    %116 = vector.broadcast %cst_35 : f32 to vector<1x256xf32>
    %117 = arith.select %102, %115, %116 : vector<1x256xi1>, vector<1x256xf32>
    %c0_i32_36 = arith.constant 0 : i32
    %118 = vector.broadcast %c0_i32_36 : i32 to vector<1x256xi32>
    %119 = arith.addi %51, %118 : vector<1x256xi32>
    %c0_i32_37 = arith.constant 0 : i32
    %120 = vector.broadcast %c0_i32_37 : i32 to vector<1x256xi32>
    %121 = arith.cmpi sge, %119, %120 : vector<1x256xi32>
    %c16_i32_38 = arith.constant 16 : i32
    %122 = vector.broadcast %c16_i32_38 : i32 to vector<1x256xi32>
    %123 = arith.cmpi slt, %119, %122 : vector<1x256xi32>
    %124 = arith.andi %121, %123 : vector<1x256xi1>
    %c3 = arith.constant 3 : index
    %c80 = arith.constant 80 : index
    %125 = vector.load %arg9[%c3, %c80] : memref<49x512xf32, #tpu.memory_space<vmem>>, vector<1x256xf32>
    %c10 = arith.constant 10 : index
    %c96 = arith.constant 96 : index
    %126 = vector.load %arg9[%c10, %c96] : memref<49x512xf32, #tpu.memory_space<vmem>>, vector<1x256xf32>
    %c17 = arith.constant 17 : index
    %c112 = arith.constant 112 : index
    %127 = vector.load %arg9[%c17, %c112] : memref<49x512xf32, #tpu.memory_space<vmem>>, vector<1x256xf32>
    %c24 = arith.constant 24 : index
    %c128_39 = arith.constant 128 : index
    %128 = vector.load %arg9[%c24, %c128_39] : memref<49x512xf32, #tpu.memory_space<vmem>>, vector<1x256xf32>
    %c31 = arith.constant 31 : index
    %c144 = arith.constant 144 : index
    %129 = vector.load %arg9[%c31, %c144] : memref<49x512xf32, #tpu.memory_space<vmem>>, vector<1x256xf32>
    %c38 = arith.constant 38 : index
    %c160 = arith.constant 160 : index
    %130 = vector.load %arg9[%c38, %c160] : memref<49x512xf32, #tpu.memory_space<vmem>>, vector<1x256xf32>
    %c45 = arith.constant 45 : index
    %c176 = arith.constant 176 : index
    %131 = vector.load %arg9[%c45, %c176] : memref<49x512xf32, #tpu.memory_space<vmem>>, vector<1x256xf32>
    %132 = arith.addf %125, %126 : vector<1x256xf32>
    %133 = arith.addf %127, %128 : vector<1x256xf32>
    %134 = arith.addf %129, %130 : vector<1x256xf32>
    %135 = arith.addf %132, %133 : vector<1x256xf32>
    %136 = arith.addf %134, %131 : vector<1x256xf32>
    %137 = arith.addf %135, %136 : vector<1x256xf32>
    %cst_40 = arith.constant 0.000000e+00 : f32
    %138 = vector.broadcast %cst_40 : f32 to vector<1x256xf32>
    %139 = arith.select %124, %137, %138 : vector<1x256xi1>, vector<1x256xf32>
    %c1_i32_41 = arith.constant 1 : i32
    %140 = vector.broadcast %c1_i32_41 : i32 to vector<1x256xi32>
    %141 = arith.addi %51, %140 : vector<1x256xi32>
    %c0_i32_42 = arith.constant 0 : i32
    %142 = vector.broadcast %c0_i32_42 : i32 to vector<1x256xi32>
    %143 = arith.cmpi sge, %141, %142 : vector<1x256xi32>
    %c16_i32_43 = arith.constant 16 : i32
    %144 = vector.broadcast %c16_i32_43 : i32 to vector<1x256xi32>
    %145 = arith.cmpi slt, %141, %144 : vector<1x256xi32>
    %146 = arith.andi %143, %145 : vector<1x256xi1>
    %c4 = arith.constant 4 : index
    %c81 = arith.constant 81 : index
    %147 = vector.load %arg9[%c4, %c81] : memref<49x512xf32, #tpu.memory_space<vmem>>, vector<1x256xf32>
    %c11 = arith.constant 11 : index
    %c97 = arith.constant 97 : index
    %148 = vector.load %arg9[%c11, %c97] : memref<49x512xf32, #tpu.memory_space<vmem>>, vector<1x256xf32>
    %c18 = arith.constant 18 : index
    %c113 = arith.constant 113 : index
    %149 = vector.load %arg9[%c18, %c113] : memref<49x512xf32, #tpu.memory_space<vmem>>, vector<1x256xf32>
    %c25 = arith.constant 25 : index
    %c129 = arith.constant 129 : index
    %150 = vector.load %arg9[%c25, %c129] : memref<49x512xf32, #tpu.memory_space<vmem>>, vector<1x256xf32>
    %c32 = arith.constant 32 : index
    %c145 = arith.constant 145 : index
    %151 = vector.load %arg9[%c32, %c145] : memref<49x512xf32, #tpu.memory_space<vmem>>, vector<1x256xf32>
    %c39 = arith.constant 39 : index
    %c161 = arith.constant 161 : index
    %152 = vector.load %arg9[%c39, %c161] : memref<49x512xf32, #tpu.memory_space<vmem>>, vector<1x256xf32>
    %c46 = arith.constant 46 : index
    %c177 = arith.constant 177 : index
    %153 = vector.load %arg9[%c46, %c177] : memref<49x512xf32, #tpu.memory_space<vmem>>, vector<1x256xf32>
    %154 = arith.addf %147, %148 : vector<1x256xf32>
    %155 = arith.addf %149, %150 : vector<1x256xf32>
    %156 = arith.addf %151, %152 : vector<1x256xf32>
    %157 = arith.addf %154, %155 : vector<1x256xf32>
    %158 = arith.addf %156, %153 : vector<1x256xf32>
    %159 = arith.addf %157, %158 : vector<1x256xf32>
    %cst_44 = arith.constant 0.000000e+00 : f32
    %160 = vector.broadcast %cst_44 : f32 to vector<1x256xf32>
    %161 = arith.select %146, %159, %160 : vector<1x256xi1>, vector<1x256xf32>
    %c2_i32 = arith.constant 2 : i32
    %162 = vector.broadcast %c2_i32 : i32 to vector<1x256xi32>
    %163 = arith.addi %51, %162 : vector<1x256xi32>
    %c0_i32_45 = arith.constant 0 : i32
    %164 = vector.broadcast %c0_i32_45 : i32 to vector<1x256xi32>
    %165 = arith.cmpi sge, %163, %164 : vector<1x256xi32>
    %c16_i32_46 = arith.constant 16 : i32
    %166 = vector.broadcast %c16_i32_46 : i32 to vector<1x256xi32>
    %167 = arith.cmpi slt, %163, %166 : vector<1x256xi32>
    %168 = arith.andi %165, %167 : vector<1x256xi1>
    %c5 = arith.constant 5 : index
    %c82 = arith.constant 82 : index
    %169 = vector.load %arg9[%c5, %c82] : memref<49x512xf32, #tpu.memory_space<vmem>>, vector<1x256xf32>
    %c12 = arith.constant 12 : index
    %c98 = arith.constant 98 : index
    %170 = vector.load %arg9[%c12, %c98] : memref<49x512xf32, #tpu.memory_space<vmem>>, vector<1x256xf32>
    %c19 = arith.constant 19 : index
    %c114 = arith.constant 114 : index
    %171 = vector.load %arg9[%c19, %c114] : memref<49x512xf32, #tpu.memory_space<vmem>>, vector<1x256xf32>
    %c26 = arith.constant 26 : index
    %c130 = arith.constant 130 : index
    %172 = vector.load %arg9[%c26, %c130] : memref<49x512xf32, #tpu.memory_space<vmem>>, vector<1x256xf32>
    %c33 = arith.constant 33 : index
    %c146 = arith.constant 146 : index
    %173 = vector.load %arg9[%c33, %c146] : memref<49x512xf32, #tpu.memory_space<vmem>>, vector<1x256xf32>
    %c40 = arith.constant 40 : index
    %c162 = arith.constant 162 : index
    %174 = vector.load %arg9[%c40, %c162] : memref<49x512xf32, #tpu.memory_space<vmem>>, vector<1x256xf32>
    %c47 = arith.constant 47 : index
    %c178 = arith.constant 178 : index
    %175 = vector.load %arg9[%c47, %c178] : memref<49x512xf32, #tpu.memory_space<vmem>>, vector<1x256xf32>
    %176 = arith.addf %169, %170 : vector<1x256xf32>
    %177 = arith.addf %171, %172 : vector<1x256xf32>
    %178 = arith.addf %173, %174 : vector<1x256xf32>
    %179 = arith.addf %176, %177 : vector<1x256xf32>
    %180 = arith.addf %178, %175 : vector<1x256xf32>
    %181 = arith.addf %179, %180 : vector<1x256xf32>
    %cst_47 = arith.constant 0.000000e+00 : f32
    %182 = vector.broadcast %cst_47 : f32 to vector<1x256xf32>
    %183 = arith.select %168, %181, %182 : vector<1x256xi1>, vector<1x256xf32>
    %c3_i32 = arith.constant 3 : i32
    %184 = vector.broadcast %c3_i32 : i32 to vector<1x256xi32>
    %185 = arith.addi %51, %184 : vector<1x256xi32>
    %c0_i32_48 = arith.constant 0 : i32
    %186 = vector.broadcast %c0_i32_48 : i32 to vector<1x256xi32>
    %187 = arith.cmpi sge, %185, %186 : vector<1x256xi32>
    %c16_i32_49 = arith.constant 16 : i32
    %188 = vector.broadcast %c16_i32_49 : i32 to vector<1x256xi32>
    %189 = arith.cmpi slt, %185, %188 : vector<1x256xi32>
    %190 = arith.andi %187, %189 : vector<1x256xi1>
    %c6 = arith.constant 6 : index
    %c83 = arith.constant 83 : index
    %191 = vector.load %arg9[%c6, %c83] : memref<49x512xf32, #tpu.memory_space<vmem>>, vector<1x256xf32>
    %c13 = arith.constant 13 : index
    %c99 = arith.constant 99 : index
    %192 = vector.load %arg9[%c13, %c99] : memref<49x512xf32, #tpu.memory_space<vmem>>, vector<1x256xf32>
    %c20 = arith.constant 20 : index
    %c115 = arith.constant 115 : index
    %193 = vector.load %arg9[%c20, %c115] : memref<49x512xf32, #tpu.memory_space<vmem>>, vector<1x256xf32>
    %c27 = arith.constant 27 : index
    %c131 = arith.constant 131 : index
    %194 = vector.load %arg9[%c27, %c131] : memref<49x512xf32, #tpu.memory_space<vmem>>, vector<1x256xf32>
    %c34 = arith.constant 34 : index
    %c147 = arith.constant 147 : index
    %195 = vector.load %arg9[%c34, %c147] : memref<49x512xf32, #tpu.memory_space<vmem>>, vector<1x256xf32>
    %c41 = arith.constant 41 : index
    %c163 = arith.constant 163 : index
    %196 = vector.load %arg9[%c41, %c163] : memref<49x512xf32, #tpu.memory_space<vmem>>, vector<1x256xf32>
    %c48 = arith.constant 48 : index
    %c179 = arith.constant 179 : index
    %197 = vector.load %arg9[%c48, %c179] : memref<49x512xf32, #tpu.memory_space<vmem>>, vector<1x256xf32>
    %198 = arith.addf %191, %192 : vector<1x256xf32>
    %199 = arith.addf %193, %194 : vector<1x256xf32>
    %200 = arith.addf %195, %196 : vector<1x256xf32>
    %201 = arith.addf %198, %199 : vector<1x256xf32>
    %202 = arith.addf %200, %197 : vector<1x256xf32>
    %203 = arith.addf %201, %202 : vector<1x256xf32>
    %cst_50 = arith.constant 0.000000e+00 : f32
    %204 = vector.broadcast %cst_50 : f32 to vector<1x256xf32>
    %205 = arith.select %190, %203, %204 : vector<1x256xi1>, vector<1x256xf32>
    %206 = arith.addf %73, %95 : vector<1x256xf32>
    %207 = arith.addf %117, %139 : vector<1x256xf32>
    %208 = arith.addf %161, %183 : vector<1x256xf32>
    %209 = arith.addf %206, %207 : vector<1x256xf32>
    %210 = arith.addf %208, %205 : vector<1x256xf32>
    %211 = arith.addf %209, %210 : vector<1x256xf32>
    %c0_51 = arith.constant 0 : index
    %212 = memref.load %arg7[%c0_51] : memref<1xf32, #tpu.memory_space<smem>>
    %213 = vector.broadcast %212 : f32 to vector<1x256xf32>
    %214 = arith.addf %211, %213 : vector<1x256xf32>
    %215 = arith.negf %214 : vector<1x256xf32>
    %216 = math.exp %215 : vector<1x256xf32>
    %cst_52 = arith.constant 1.000000e+00 : f32
    %217 = vector.broadcast %cst_52 : f32 to vector<1x256xf32>
    %218 = arith.addf %217, %216 : vector<1x256xf32>
    %219 = arith.divf %217, %218 : vector<1x256xf32>
    %220 = vector.broadcast %219 : vector<1x256xf32> to vector<16x256xf32>
    %221 = arith.mulf %28, %220 : vector<16x256xf32>
    %c0_53 = arith.constant 0 : index
    %c0_54 = arith.constant 0 : index
    %c0_55 = arith.constant 0 : index
    %222 = vector.load %arg8[%c0_53, %c0_54, %c0_55] : memref<1x16x256xf32, #tpu.memory_space<vmem>>, vector<1x16x256xf32>
    %223 = vector.shape_cast %222 : vector<1x16x256xf32> to vector<16x256xf32>
    %224 = vector.shape_cast %221 : vector<16x256xf32> to vector<1x16x256xf32>
    tpu.vector_store %arg8[%c0_53, %c0_54, %c0_55], %224 {strides = array<i32>} : memref<1x16x256xf32, #tpu.memory_space<vmem>>, vector<1x16x256xf32>,
    return
  }
  func.func @transform_0(%arg0: i32) -> (i32, i32, i32) {
    %c0_i32 = arith.constant 0 : i32
    %c0_i32_0 = arith.constant 0 : i32
    %c0_i32_1 = arith.constant 0 : i32
    return %arg0, %c0_i32, %c0_i32_0 : i32, i32, i32
  }
  func.func @transform_1(%arg0: i32) -> (i32, i32) {
    %c0_i32 = arith.constant 0 : i32
    %c0_i32_0 = arith.constant 0 : i32
    %c0_i32_1 = arith.constant 0 : i32
    return %c0_i32, %c0_i32_0 : i32, i32
  }
  func.func @transform_2(%arg0: i32) -> (i32, i32) {
    %c0_i32 = arith.constant 0 : i32
    %c0_i32_0 = arith.constant 0 : i32
    %c0_i32_1 = arith.constant 0 : i32
    return %c0_i32, %c0_i32_0 : i32, i32
  }
  func.func @transform_3(%arg0: i32) -> (i32, i32) {
    %c0_i32 = arith.constant 0 : i32
    %c0_i32_0 = arith.constant 0 : i32
    %c0_i32_1 = arith.constant 0 : i32
    return %c0_i32, %c0_i32_0 : i32, i32
  }
  func.func @transform_4(%arg0: i32) -> (i32, i32) {
    %c0_i32 = arith.constant 0 : i32
    %c0_i32_0 = arith.constant 0 : i32
    %c0_i32_1 = arith.constant 0 : i32
    return %c0_i32, %c0_i32_0 : i32, i32
  }
  func.func @transform_5(%arg0: i32) -> (i32, i32) {
    %c0_i32 = arith.constant 0 : i32
    %c0_i32_0 = arith.constant 0 : i32
    %c0_i32_1 = arith.constant 0 : i32
    return %c0_i32, %c0_i32_0 : i32, i32
  }
  func.func @transform_6(%arg0: i32) -> i32 {
    %c0_i32 = arith.constant 0 : i32
    %c0_i32_0 = arith.constant 0 : i32
    return %c0_i32 : i32
  }
  func.func @transform_7(%arg0: i32) -> (i32, i32, i32) {
    %c0_i32 = arith.constant 0 : i32
    %c0_i32_0 = arith.constant 0 : i32
    %c0_i32_1 = arith.constant 0 : i32
    return %arg0, %c0_i32, %c0_i32_0 : i32, i32, i32
  }
}

</mosaic_0001>

<llo_original>
// kernel: tpu_custom_call.1
$region0: #{tpu_custom_call.1}
  #allocation0 [shape = 'u32[]', space=smem, size = 0x4, offset = 0x4, fixed_abs, tag = 'smem constant byte address 0x4 - core index']
  #allocation1 [shape = 'u32[72,128]{1,0:T(1,128)}', space=vmem, size = 0x9000, scoped, tag = 'internal scratch']
  #allocation2 [shape = 'f32[49,512]{1,0:T(8,128)}', space=vmem, size = 0x1c000, scoped, tag = 'scratch operand']
  #allocation3 [shape = 'f32[1]{0:T(128)S(6)}', space=smem, size = 0x200, scoped, tag = 'scoped memory for tpu_custom_call.1']
  %s0 = inlined_call_operand.vmem [shape: f32[2,16,256], index: 0, kind: input, shape index: {}]
  %s1 = inlined_call_operand.vmem [shape: f32[16,2], index: 1, kind: input, shape index: {}]
  %s2 = inlined_call_operand.vmem [shape: f32[1,2], index: 2, kind: input, shape index: {}]
  %s3 = inlined_call_operand.vmem [shape: f32[16,2], index: 3, kind: input, shape index: {}]
  %s4 = inlined_call_operand.vmem [shape: f32[16,1], index: 4, kind: input, shape index: {}]
  %s5 = inlined_call_operand.vmem [shape: f32[49,16], index: 5, kind: input, shape index: {}]
  %s6 = inlined_call_operand.<no memory space> [shape: f32[1], index: 6, kind: input, shape index: {}]
  %s7 = inlined_call_operand.hbm [shape: f32[2,16,256], index: 7, kind: output, shape index: {}]
  %s8 = sld [smem:[#allocation0]]
  $region61: #{tpu_custom_call.1} parent=0
    _
  %s10 = ssub.s32 1, %s8
  %s11 = scalar_select 0, %s10, %s8
  %12 = sst [smem:[#allocation3]] %s6
  $region1: #{tpu_custom_call.1} parent=0
    #allocation4 [shape = 'u8[32768]{0}', space=vmem, size = 0x8000, scoped, tag = 'output window, operand 0']
    #allocation5 [shape = 's32[2]{0}', space=sflag, size = 0x8, scoped, tag = 'scoped memory for tpu_custom_call.1']
    %13 = vsyncpa [#allocation5], 0
    %s14 = scalar_lea.sflag [#allocation5], 1
    %15 = vsyncpa %s14, 0
    loop: start=0, step=1, limit=4
    $region2: #{tpu_custom_call.1} parent=1 // loop_pre_header
      _
    $region3: #{tpu_custom_call.1} parent=1 // loop_header
      %s17 = sphi 0, %s21
      %p18 = scmp.ge.s32.totalorder %s17, 4
      %s27 = sphi 0, %s29
      %s30 = sphi 0, %s27
      %s31 = sphi 0, %s30
      %s47 = sphi 0, %s31
      %s51 = sphi 0, %s51
      %s53 = sphi 0, %s51
      %s54 = sphi 0, %s53
      %s68 = sphi 0, %s54
      %s72 = sphi 0, %s72
      %s74 = sphi 0, %s72
      %s75 = sphi 0, %s74
      %s89 = sphi 0, %s75
      %s93 = sphi 0, %s93
      %s95 = sphi 0, %s93
      %s96 = sphi 0, %s95
      %s110 = sphi 0, %s96
      %s114 = sphi 0, %s114
      %s116 = sphi 0, %s114
      %s117 = sphi 0, %s116
      %s131 = sphi 0, %s117
      %s135 = sphi 0, %s135
      %s137 = sphi 0, %s135
      %s138 = sphi 0, %s137
      %s152 = sphi 0, %s138
      %s156 = sphi 0, %s156
      %s158 = sphi 0, %s156
      %s159 = sphi 0, %s158
      %s173 = sphi 0, %s159
      %s179 = sphi 0, %s181
      %s182 = sphi 0, %s179
      %s183 = sphi 0, %s182
      %s199 = sphi 0, %s183
    $region4: #{tpu_custom_call.1} parent=1 // loop_header_branch
      %20 = sbr.rel (%p18) target = $region8
    $region5: #{tpu_custom_call.1} parent=1 // loop_body
      %s22 = ssub.s32 %s17, 1
      %s23 = ssub.s32 %s17, 2
      %s24 = sadd.s32 %s17, 1
      %s25 = ssub.s32 %s17, %s24
      %p26 = scmp.eq.s32.totalorder %s25, 0
      %s28 = sadd.s32 %s27, 1
      %s29 = scalar_select %p26, %s27, %s28
      %p32 = pneg %p26
      %p33 = scmp.eq.s32.totalorder %s17, 1
      %p34 = por %p32, %p33
      %p35 = scmp.ne.s32.totalorder %s27, %s30
      %p36 = scmp.eq.s32.totalorder %s17, 0
      %p37 = por %p35, %p36
      %p38 = scmp.ne.s32.totalorder %s27, %s30
      %p39 = scmp.eq.s32.totalorder %s22, 1
      %p40 = por %p38, %p39
      %p41 = scmp.ne.s32.totalorder %s30, %s31
      %p42 = scmp.eq.s32.totalorder %s22, 0
      %p43 = por %p41, %p42
      %p44 = scmp.ne.s32.totalorder %s30, %s31
      %p45 = scmp.eq.s32.totalorder %s23, 1
      %p46 = por %p44, %p45
      %p48 = scmp.ne.s32.totalorder %s31, %s47
      %p49 = scmp.eq.s32.totalorder %s23, 0
      %p50 = por %p48, %p49
      %s52 = sadd.s32 %s51, 1
      %p55 = scmp.eq.s32.totalorder %s17, 1
      %p56 = scmp.ne.s32.totalorder %s51, %s53
      %p57 = scmp.eq.s32.totalorder %s17, 0
      %p58 = por %p56, %p57
      %p59 = scmp.ne.s32.totalorder %s51, %s53
      %p60 = scmp.eq.s32.totalorder %s22, 1
      %p61 = por %p59, %p60
      %p62 = scmp.ne.s32.totalorder %s53, %s54
      %p63 = scmp.eq.s32.totalorder %s22, 0
      %p64 = por %p62, %p63
      %p65 = scmp.ne.s32.totalorder %s53, %s54
      %p66 = scmp.eq.s32.totalorder %s23, 1
      %p67 = por %p65, %p66
      %p69 = scmp.ne.s32.totalorder %s54, %s68
      %p70 = scmp.eq.s32.totalorder %s23, 0
      %p71 = por %p69, %p70
      %s73 = sadd.s32 %s72, 1
      %p76 = scmp.eq.s32.totalorder %s17, 1
      %p77 = scmp.ne.s32.totalorder %s72, %s74
      %p78 = scmp.eq.s32.totalorder %s17, 0
      %p79 = por %p77, %p78
      %p80 = scmp.ne.s32.totalorder %s72, %s74
      %p81 = scmp.eq.s32.totalorder %s22, 1
      %p82 = por %p80, %p81
      %p83 = scmp.ne.s32.totalorder %s74, %s75
      %p84 = scmp.eq.s32.totalorder %s22, 0
      %p85 = por %p83, %p84
      %p86 = scmp.ne.s32.totalorder %s74, %s75
      %p87 = scmp.eq.s32.totalorder %s23, 1
      %p88 = por %p86, %p87
      %p90 = scmp.ne.s32.totalorder %s75, %s89
      %p91 = scmp.eq.s32.totalorder %s23, 0
      %p92 = por %p90, %p91
      %s94 = sadd.s32 %s93, 1
      %p97 = scmp.eq.s32.totalorder %s17, 1
      %p98 = scmp.ne.s32.totalorder %s93, %s95
      %p99 = scmp.eq.s32.totalorder %s17, 0
      %p100 = por %p98, %p99
      %p101 = scmp.ne.s32.totalorder %s93, %s95
      %p102 = scmp.eq.s32.totalorder %s22, 1
      %p103 = por %p101, %p102
      %p104 = scmp.ne.s32.totalorder %s95, %s96
      %p105 = scmp.eq.s32.totalorder %s22, 0
      %p106 = por %p104, %p105
      %p107 = scmp.ne.s32.totalorder %s95, %s96
      %p108 = scmp.eq.s32.totalorder %s23, 1
      %p109 = por %p107, %p108
      %p111 = scmp.ne.s32.totalorder %s96, %s110
      %p112 = scmp.eq.s32.totalorder %s23, 0
      %p113 = por %p111, %p112
      %s115 = sadd.s32 %s114, 1
      %p118 = scmp.eq.s32.totalorder %s17, 1
      %p119 = scmp.ne.s32.totalorder %s114, %s116
      %p120 = scmp.eq.s32.totalorder %s17, 0
      %p121 = por %p119, %p120
      %p122 = scmp.ne.s32.totalorder %s114, %s116
      %p123 = scmp.eq.s32.totalorder %s22, 1
      %p124 = por %p122, %p123
      %p125 = scmp.ne.s32.totalorder %s116, %s117
      %p126 = scmp.eq.s32.totalorder %s22, 0
      %p127 = por %p125, %p126
      %p128 = scmp.ne.s32.totalorder %s116, %s117
      %p129 = scmp.eq.s32.totalorder %s23, 1
      %p130 = por %p128, %p129
      %p132 = scmp.ne.s32.totalorder %s117, %s131
      %p133 = scmp.eq.s32.totalorder %s23, 0
      %p134 = por %p132, %p133
      %s136 = sadd.s32 %s135, 1
      %p139 = scmp.eq.s32.totalorder %s17, 1
      %p140 = scmp.ne.s32.totalorder %s135, %s137
      %p141 = scmp.eq.s32.totalorder %s17, 0
      %p142 = por %p140, %p141
      %p143 = scmp.ne.s32.totalorder %s135, %s137
      %p144 = scmp.eq.s32.totalorder %s22, 1
      %p145 = por %p143, %p144
      %p146 = scmp.ne.s32.totalorder %s137, %s138
      %p147 = scmp.eq.s32.totalorder %s22, 0
      %p148 = por %p146, %p147
      %p149 = scmp.ne.s32.totalorder %s137, %s138
      %p150 = scmp.eq.s32.totalorder %s23, 1
      %p151 = por %p149, %p150
      %p153 = scmp.ne.s32.totalorder %s138, %s152
      %p154 = scmp.eq.s32.totalorder %s23, 0
      %p155 = por %p153, %p154
      %s157 = sadd.s32 %s156, 1
      %p160 = scmp.eq.s32.totalorder %s17, 1
      %p161 = scmp.ne.s32.totalorder %s156, %s158
      %p162 = scmp.eq.s32.totalorder %s17, 0
      %p163 = por %p161, %p162
      %p164 = scmp.ne.s32.totalorder %s156, %s158
      %p165 = scmp.eq.s32.totalorder %s22, 1
      %p166 = por %p164, %p165
      %p167 = scmp.ne.s32.totalorder %s158, %s159
      %p168 = scmp.eq.s32.totalorder %s22, 0
      %p169 = por %p167, %p168
      %p170 = scmp.ne.s32.totalorder %s158, %s159
      %p171 = scmp.eq.s32.totalorder %s23, 1
      %p172 = por %p170, %p171
      %p174 = scmp.ne.s32.totalorder %s159, %s173
      %p175 = scmp.eq.s32.totalorder %s23, 0
      %p176 = por %p174, %p175
      %s177 = ssub.s32 %s17, %s24
      %p178 = scmp.eq.s32.totalorder %s177, 0
      %s180 = sadd.s32 %s179, 1
      %s181 = scalar_select %p178, %s179, %s180
      %p184 = pneg %p178
      %p185 = scmp.eq.s32.totalorder %s17, 1
      %p186 = por %p184, %p185
      %p187 = scmp.ne.s32.totalorder %s179, %s182
      %p188 = scmp.eq.s32.totalorder %s17, 0
      %p189 = por %p187, %p188
      %p190 = scmp.ne.s32.totalorder %s179, %s182
      %p191 = scmp.eq.s32.totalorder %s22, 1
      %p192 = por %p190, %p191
      %p193 = scmp.ne.s32.totalorder %s182, %s183
      %p194 = scmp.eq.s32.totalorder %s22, 0
      %p195 = por %p193, %p194
      %p196 = scmp.ne.s32.totalorder %s182, %s183
      %p197 = scmp.eq.s32.totalorder %s23, 1
      %p198 = por %p196, %p197
      %p200 = scmp.ne.s32.totalorder %s183, %s199
      %p201 = scmp.eq.s32.totalorder %s23, 0
      %p202 = por %p200, %p201
      %p203 = scmp.le.s32.totalorder 1, %s17
      %p204 = scmp.lt.s32.totalorder %s17, 3
      %p205 = pnand %p203, %p204
      %p206 = pneg %p205
      // Predicated region
      $region9: #{tpu_custom_call.1} parent=5 // pred_check
        _
      $region10: #{tpu_custom_call.1} parent=5 // pred_check_branch
        %208 = sbr.rel (%p205) target = $region12
      $region11: #{tpu_custom_call.1} parent=5 // pred_region
        %s209 = ssub.s32 %s17, 1
        // Predicated region
        $region13: #{tpu_custom_call.1} parent=11 // pred_check
          %p210 = pneg %p64
        $region14: #{tpu_custom_call.1} parent=11 // pred_check_branch
          %212 = sbr.rel (%p210) target = $region16
        $region15: #{tpu_custom_call.1} parent=11 // pred_region
          _
        $region16: #{tpu_custom_call.1} parent=11 // pred_fallthru
          _
        // Predicated region
        $region17: #{tpu_custom_call.1} parent=11 // pred_check
          %p213 = pneg %p85
        $region18: #{tpu_custom_call.1} parent=11 // pred_check_branch
          %215 = sbr.rel (%p213) target = $region20
        $region19: #{tpu_custom_call.1} parent=11 // pred_region
          _
        $region20: #{tpu_custom_call.1} parent=11 // pred_fallthru
          _
        // Predicated region
        $region21: #{tpu_custom_call.1} parent=11 // pred_check
          %p216 = pneg %p106
        $region22: #{tpu_custom_call.1} parent=11 // pred_check_branch
          %218 = sbr.rel (%p216) target = $region24
        $region23: #{tpu_custom_call.1} parent=11 // pred_region
          _
        $region24: #{tpu_custom_call.1} parent=11 // pred_fallthru
          _
        // Predicated region
        $region25: #{tpu_custom_call.1} parent=11 // pred_check
          %p219 = pneg %p127
        $region26: #{tpu_custom_call.1} parent=11 // pred_check_branch
          %221 = sbr.rel (%p219) target = $region28
        $region27: #{tpu_custom_call.1} parent=11 // pred_region
          _
        $region28: #{tpu_custom_call.1} parent=11 // pred_fallthru
          _
        // Predicated region
        $region29: #{tpu_custom_call.1} parent=11 // pred_check
          %p222 = pneg %p148
        $region30: #{tpu_custom_call.1} parent=11 // pred_check_branch
          %224 = sbr.rel (%p222) target = $region32
        $region31: #{tpu_custom_call.1} parent=11 // pred_region
          _
        $region32: #{tpu_custom_call.1} parent=11 // pred_fallthru
          _
        // Predicated region
        $region33: #{tpu_custom_call.1} parent=11 // pred_check
          %p225 = pneg %p169
        $region34: #{tpu_custom_call.1} parent=11 // pred_check_branch
          %227 = sbr.rel (%p225) target = $region36
        $region35: #{tpu_custom_call.1} parent=11 // pred_region
          _
        $region36: #{tpu_custom_call.1} parent=11 // pred_fallthru
          _
      $region12: #{tpu_custom_call.1} parent=5 // pred_fallthru
        _
      %p228 = scmp.lt.s32.totalorder %s17, 2
      // Predicated region
      $region37: #{tpu_custom_call.1} parent=5 // pred_check
        %p229 = pneg %p228
      $region38: #{tpu_custom_call.1} parent=5 // pred_check_branch
        %231 = sbr.rel (%p229) target = $region40
      $region39: #{tpu_custom_call.1} parent=5 // pred_region
        // Predicated region
        $region41: #{tpu_custom_call.1} parent=39 // pred_check
          %p232 = pneg %p37
        $region42: #{tpu_custom_call.1} parent=39 // pred_check_branch
          %234 = sbr.rel (%p232) target = $region44
        $region43: #{tpu_custom_call.1} parent=39 // pred_region
          %p235 = scmp.lt.s32.totalorder %s17, 1
          %s236 = scalar_select %p235, %s17, 1
          %s237 = smul.addr %s236, 4
          %s238 = smul.addr %s237, 8
          %s239 = scalar_lea.vmem %s0, %s238
        $region44: #{tpu_custom_call.1} parent=39 // pred_fallthru
          _
      $region40: #{tpu_custom_call.1} parent=5 // pred_fallthru
        _
      %p240 = scmp.le.s32.totalorder 1, %s17
      %p241 = scmp.lt.s32.totalorder %s17, 3
      %p242 = pnand %p240, %p241
      %p243 = pneg %p242
      // Predicated region
      $region45: #{tpu_custom_call.1} parent=5 // pred_check
        _
      $region46: #{tpu_custom_call.1} parent=5 // pred_check_branch
        %245 = sbr.rel (%p242) target = $region48
      $region47: #{tpu_custom_call.1} parent=5 // pred_region
        %s246 = ssub.s32 %s17, 1
        %p247 = scmp.lt.s32.totalorder %s22, 1
        %s248 = scalar_select %p247, %s22, 1
        %s249 = smul.addr %s248, 4
        %s250 = smul.addr %s249, 8
        %s251 = scalar_lea.vmem %s0, %s250
        %p252 = pneg %p43
        %p253 = pneg %p40
        %p254 = pneg %p64
        %p255 = pneg %p61
        %p256 = pneg %p85
        %p257 = pneg %p82
        %p258 = pneg %p106
        %p259 = pneg %p103
        %p260 = pneg %p127
        %p261 = pneg %p124
        %p262 = pneg %p148
        %p263 = pneg %p145
        %p264 = pneg %p169
        %p265 = pneg %p166
        %p266 = pneg %p195
        %p267 = pneg %p192
        %s268 = sand.u32 %s182, 1
        %s269 = scalar_lea.sflag [#allocation5], %s268
        %s270 = sand.u32 %s182, 1
        %s271 = smul.addr %s270, 32
        %s272 = scalar_lea.vmem [#allocation4], %s271
        %p273 = scmp.lt.s32.totalorder %s22, 1
        %s274 = scalar_select %p273, %s22, 1
        %s275 = smul.addr %s274, 4
        %s276 = smul.addr %s275, 8
        %s277 = scalar_lea.vmem %s0, %s276
        %v278 = vld [vmem:[%s277] sm:$0xff]
        %v279 = vld [vmem:[%s277 + $0x8] sm:$0xff]
        %v280 = vld [vmem:[%s277 + $0x10] sm:$0xff]
        %v281 = vld [vmem:[%s277 + $0x18] sm:$0xff]
        %v282 = vadd.f32 %v278, %v279
        %283 = vadd.xlane.f32.xlu0 %v282
        %v284 = vpop.xlane.xlu0 %283
        %v285 = vadd.f32 %v280, %v281
        %286 = vadd.xlane.f32.xlu0 %v285
        %v287 = vpop.xlane.xlu0 %286
        %v288 = vrcp.pop 256.0
        %v289 = vmul.f32 256.0, %v288
        %v290 = vsub.f32 1.0, %v289
        %v291 = vmul.f32 %v288, %v290
        %v292 = vadd.f32 %v288, %v291
        %vm293 = vweird.f32 %v288
        %v294 = vsel %vm293, %v288, %v292
        %v295 = vmul.f32 %v284, %v294
        %v296 = vmul.f32 %v287, %v294
        %v297 = vld [vmem:[%s1] sm:$0xff]
        %v298 = vld [vmem:[%s1 + $0x8] sm:$0xff]
        %v299 = vmul.f32 %v297, %v295
        %v300 = vmul.f32 %v298, %v296
        %vm301 = vcmask 15360
        %v302 = vsel %vm301, %v299, 0.0
        %v303 = vsel %vm301, %v300, 0.0
        %v304 = vadd.f32 %v302, %v303
        %v305 = vrot.slane %v304, 4
        %v306 = vadd.f32 %v304, %v305
        %v307 = vrot.slane %v306, 2
        %v308 = vadd.f32 %v306, %v307
        %v309 = vrot.slane %v308, 1
        %v310 = vadd.f32 %v308, %v309
        %v311 = vld [vmem:[%s2] sm:$0x1]
        %v312 = vadd.f32 %v310, %v311
        %v313 = vmax.f32 %v312, 0.0
        %v314 = vld [vmem:[%s3] sm:$0xff]
        %v315 = vld [vmem:[%s3 + $0x8] sm:$0xff]
        %v316 = vperm.slane %v313, 0
        %v317 = vmul.f32 %v314, %v316
        %v318 = vmul.f32 %v315, %v316
        %v319 = vsel %vm301, %v317, 0.0
        %320 = vadd.xlane.f32.xlu0 %v319
        %v321 = vpop.xlane.xlu0 %320
        %v322 = vsel %vm301, %v318, 0.0
        %323 = vadd.xlane.f32.xlu0 %v322
        %v324 = vpop.xlane.xlu0 %323
        %v325 = vld [vmem:[%s4] sm:$0xff]
        %v326 = vld [vmem:[%s4 + $0x8] sm:$0xff]
        %v327 = vadd.f32 %v321, %v325
        %v328 = vadd.f32 %v324, %v326
        %v329 = vxor.u32 %v327, 2147483648
        %v330 = vxor.u32 %v328, 2147483648
        %v331 = vmul.f32 %v329, 1.442695
        %v332 = vpow.pop %v331
        %v333 = vmul.f32 %v330, 1.442695
        %v334 = vpow.pop %v333
        %v335 = vadd.f32 %v332, 1.0
        %v336 = vadd.f32 %v334, 1.0
        %v337 = vrcp.pop %v335
        %v338 = vmul.f32 %v335, %v337
        %v339 = vsub.f32 1.0, %v338
        %v340 = vmul.f32 %v337, %v339
        %v341 = vadd.f32 %v337, %v340
        %vm342 = vweird.f32 %v335
        %vm343 = vweird.f32 %v337
        %vm344 = vmor %vm342, %vm343
        %v345 = vsel %vm344, %v337, %v341
        %v346 = vand.u32 2147483647, %v335
        %vm347 = vcmp.eq.f32.partialorder %v346, 8.507059e+37
        %v348 = vand.u32 %v335, 2147483648
        %v349 = vor.u32 1.1754944e-38, %v348
        %v350 = vsel %vm347, %v349, %v345
        %v351 = vmul.f32 1.0, %v350
        %v352 = vrcp.pop %v336
        %v353 = vmul.f32 %v336, %v352
        %v354 = vsub.f32 1.0, %v353
        %v355 = vmul.f32 %v352, %v354
        %v356 = vadd.f32 %v352, %v355
        %vm357 = vweird.f32 %v336
        %vm358 = vweird.f32 %v352
        %vm359 = vmor %vm357, %vm358
        %v360 = vsel %vm359, %v352, %v356
        %v361 = vand.u32 2147483647, %v336
        %vm362 = vcmp.eq.f32.partialorder %v361, 8.507059e+37
        %v363 = vand.u32 %v336, 2147483648
        %v364 = vor.u32 1.1754944e-38, %v363
        %v365 = vsel %vm362, %v364, %v360
        %v366 = vmul.f32 1.0, %v365
        %368 = vset.pattern.permute.xlu0 0
        %369 = vperm.xlu0 %368, %v351
        %v370 = vpop.permute.xlu0 %369
        %373 = vset.pattern.permute.xlu0 0
        %374 = vperm.xlu0 %373, %v366
        %v375 = vpop.permute.xlu0 %374
        %v377 = vmul.f32 %v278, %v370
        %v378 = vmul.f32 %v279, %v370
        %v379 = vmul.f32 %v280, %v375
        %v380 = vmul.f32 %v281, %v375
        %v381 = vld [vmem:[%s5] sm:$0xff]
        %v382 = vld [vmem:[%s5 + $0x8] sm:$0xff]
        %v383 = vld [vmem:[%s5 + $0x10] sm:$0xff]
        %v384 = vld [vmem:[%s5 + $0x18] sm:$0xff]
        %v385 = vld [vmem:[%s5 + $0x20] sm:$0xff]
        %v386 = vld [vmem:[%s5 + $0x28] sm:$0xff]
        %v387 = vld [vmem:[%s5 + $0x30] sm:$0x1]
        %vm388 = vcmask 130048
        %v390 = vsel %vm388, %v381, 0
        %v393 = vsel %vm388, %v382, 0
        %v396 = vsel %vm388, %v383, 0
        %v399 = vsel %vm388, %v384, 0
        %v402 = vsel %vm388, %v385, 0
        %v405 = vsel %vm388, %v386, 0
        %v408 = vsel %vm388, %v387, 0
        %410 = vmatpush.msra.mxu0 0.0
        %411 = vmatpush.msra.mxu0 0.0
        %412 = vmatpush.msra.mxu0 0.0
        %413 = vmatpush.msra.mxu0 0.0
        %414 = vmatpush.msra.mxu0 0.0
        %415 = vmatpush.msra.mxu0 0.0
        %416 = vmatpush.msra.mxu0 0.0
        %417 = vmatpush.msra.mxu0 0.0
        %418 = vmatpush.msra.mxu0 0.0
        %419 = vmatpush.msra.mxu0 0.0
        %420 = vmatpush.msra.mxu0 0.0
        %421 = vmatpush.msra.mxu0 0.0
        %422 = vmatpush.msra.mxu0 0.0
        %423 = vmatpush.msra.mxu0 0.0
        %424 = vmatpush.msra.mxu0 %v379
        %425 = vmatpush.msra.mxu0 %v377
        %426 = vmatmul.f32.gmra.mxu0 %v390
        %v427 = vpop.f32.mrf.mxu0
        %v428 = vadd.f32 0.0, %v427
        %429 = vmatmul.f32.gmra.mxu0 %v393
        %v430 = vpop.f32.mrf.mxu0
        %v431 = vadd.f32 0.0, %v430
        %432 = vmatmul.f32.gmra.mxu0 %v396
        %v433 = vpop.f32.mrf.mxu0
        %v434 = vadd.f32 0.0, %v433
        %435 = vmatmul.f32.gmra.mxu0 %v399
        %v436 = vpop.f32.mrf.mxu0
        %v437 = vadd.f32 0.0, %v436
        %438 = vmatmul.f32.gmra.mxu0 %v402
        %v439 = vpop.f32.mrf.mxu0
        %v440 = vadd.f32 0.0, %v439
        %441 = vmatmul.f32.gmra.mxu0 %v405
        %v442 = vpop.f32.mrf.mxu0
        %v443 = vadd.f32 0.0, %v442
        %444 = vmatmul.f32.gmra.mxu0 %v408
        %v445 = vpop.f32.mrf.mxu0
        %v446 = vadd.f32 0.0, %v445
        %447 = vdwg.mxu0
        %448 = vmatpush.msra.mxu0 0.0
        %449 = vmatpush.msra.mxu0 0.0
        %450 = vmatpush.msra.mxu0 0.0
        %451 = vmatpush.msra.mxu0 0.0
        %452 = vmatpush.msra.mxu0 0.0
        %453 = vmatpush.msra.mxu0 0.0
        %454 = vmatpush.msra.mxu0 0.0
        %455 = vmatpush.msra.mxu0 0.0
        %456 = vmatpush.msra.mxu0 0.0
        %457 = vmatpush.msra.mxu0 0.0
        %458 = vmatpush.msra.mxu0 0.0
        %459 = vmatpush.msra.mxu0 0.0
        %460 = vmatpush.msra.mxu0 0.0
        %461 = vmatpush.msra.mxu0 0.0
        %462 = vmatpush.msra.mxu0 %v380
        %463 = vmatpush.msra.mxu0 %v378
        %464 = vmatmul.f32.gmra.mxu0 %v390
        %v465 = vpop.f32.mrf.mxu0
        %v466 = vadd.f32 0.0, %v465
        %467 = vmatmul.f32.gmra.mxu0 %v393
        %v468 = vpop.f32.mrf.mxu0
        %v469 = vadd.f32 0.0, %v468
        %470 = vmatmul.f32.gmra.mxu0 %v396
        %v471 = vpop.f32.mrf.mxu0
        %v472 = vadd.f32 0.0, %v471
        %473 = vmatmul.f32.gmra.mxu0 %v399
        %v474 = vpop.f32.mrf.mxu0
        %v475 = vadd.f32 0.0, %v474
        %476 = vmatmul.f32.gmra.mxu0 %v402
        %v477 = vpop.f32.mrf.mxu0
        %v478 = vadd.f32 0.0, %v477
        %479 = vmatmul.f32.gmra.mxu0 %v405
        %v480 = vpop.f32.mrf.mxu0
        %v481 = vadd.f32 0.0, %v480
        %482 = vmatmul.f32.gmra.mxu0 %v408
        %v483 = vpop.f32.mrf.mxu0
        %v484 = vadd.f32 0.0, %v483
        %485 = vdwg.mxu0
        %486 = vst [vmem:[#allocation2] sm:$0xff] 0.0
        %487 = vst [vmem:[#allocation2 + $0x20] sm:$0xff] 0.0
        %488 = vst [vmem:[#allocation2 + $0x40] sm:$0xff] 0.0
        %489 = vst [vmem:[#allocation2 + $0x60] sm:$0xff] 0.0
        %490 = vst [vmem:[#allocation2 + $0x80] sm:$0xff] 0.0
        %491 = vst [vmem:[#allocation2 + $0xa0] sm:$0xff] 0.0
        %492 = vst [vmem:[#allocation2 + $0xc0] sm:$0x1] 0.0
        %493 = vst [vmem:[#allocation2 + $0x18] sm:$0xff] 0.0
        %494 = vst [vmem:[#allocation2 + $0x38] sm:$0xff] 0.0
        %495 = vst [vmem:[#allocation2 + $0x58] sm:$0xff] 0.0
        %496 = vst [vmem:[#allocation2 + $0x78] sm:$0xff] 0.0
        %497 = vst [vmem:[#allocation2 + $0x98] sm:$0xff] 0.0
        %498 = vst [vmem:[#allocation2 + $0xb8] sm:$0xff] 0.0
        %499 = vst [vmem:[#allocation2 + $0xd8] sm:$0x1] 0.0
        %500 = vst [vmem:[#allocation2 + $0x8] sm:$0xff] %v428
        %501 = vst [vmem:[#allocation2 + $0x10] sm:$0xff] %v466
        %502 = vst [vmem:[#allocation2 + $0x28] sm:$0xff] %v431
        %503 = vst [vmem:[#allocation2 + $0x30] sm:$0xff] %v469
        %504 = vst [vmem:[#allocation2 + $0x48] sm:$0xff] %v434
        %505 = vst [vmem:[#allocation2 + $0x50] sm:$0xff] %v472
        %506 = vst [vmem:[#allocation2 + $0x68] sm:$0xff] %v437
        %507 = vst [vmem:[#allocation2 + $0x70] sm:$0xff] %v475
        %508 = vst [vmem:[#allocation2 + $0x88] sm:$0xff] %v440
        %509 = vst [vmem:[#allocation2 + $0x90] sm:$0xff] %v478
        %510 = vst [vmem:[#allocation2 + $0xa8] sm:$0xff] %v443
        %511 = vst [vmem:[#allocation2 + $0xb0] sm:$0xff] %v481
        %512 = vst [vmem:[#allocation2 + $0xc8] sm:$0x1] %v446
        %513 = vst [vmem:[#allocation2 + $0xd0] sm:$0x1] %v484
        %v514 = vlaneseq
        %v515 = vand.u32 %v514, 127
        %v516 = vadd.s32 %v515, 128
        %vm517 = vcmp.lt.s32.totalorder %v515, 0
        %v518 = vsub.s32 0, %v515
        %v519 = vsel %vm517, %v518, %v515
        %v520 = vshrl.u32 %v519, 4
        %v521 = vand.u32 %v519, 15
        %v522 = vsub.s32 0, %v521
        %v523 = vsel %vm517, %v522, %v521
        %vm524 = vcmp.lt.s32.totalorder %v516, 0
        %v525 = vsub.s32 0, %v516
        %v526 = vsel %vm524, %v525, %v516
        %v527 = vshrl.u32 %v526, 4
        %v528 = vand.u32 %v526, 15
        %v529 = vsub.s32 0, %v528
        %v530 = vsel %vm524, %v529, %v528
        %vm531 = vcmp.ne.s32.totalorder %v523, 0
        %vm532 = vcmp.ne.s32.totalorder %v530, 0
        %vm533 = vcmp.lt.s32.totalorder %v523, 0
        %vm534 = vcmp.lt.s32.totalorder %v530, 0
        %vm535 = vmand %vm533, %vm531
        %vm536 = vmand %vm534, %vm532
        %v537 = vadd.s32 %v523, 16
        %v538 = vadd.s32 %v530, 16
        %v539 = vsel %vm535, %v537, %v523
        %v540 = vsel %vm536, %v538, %v530
        %v541 = vadd.s32 %v539, 4294967293
        %v542 = vadd.s32 %v540, 4294967293
        %vm543 = vcmp.ge.s32.totalorder %v541, 0
        %vm544 = vcmp.ge.s32.totalorder %v542, 0
        %vm545 = vcmp.lt.s32.totalorder %v541, 16
        %vm546 = vcmp.lt.s32.totalorder %v542, 16
        %vm547 = vmand %vm543, %vm545
        %vm548 = vmand %vm544, %vm546
        %v549 = vld [vmem:[#allocation2] ss:$8 sm:$0x7]
        %s550 = scalar_lea.vmem [#allocation2], 7
        %v551 = vld [vmem:[%s550] ss:$8 sm:$0x7]
        %s552 = scalar_lea.vmem [#allocation2], 38
        %v553 = vld [vmem:[%s552] ss:$8 sm:$0x7]
        %s554 = scalar_lea.vmem [#allocation2], 69
        %v555 = vld [vmem:[%s554] ss:$8 sm:$0x7]
        %s556 = scalar_lea.vmem [#allocation2], 108
        %v557 = vld [vmem:[%s556] ss:$8 sm:$0x7]
        %s558 = scalar_lea.vmem [#allocation2], 139
        %v559 = vld [vmem:[%s558] ss:$8 sm:$0x7]
        %s560 = scalar_lea.vmem [#allocation2], 170
        %v561 = vld [vmem:[%s560] ss:$8 sm:$0x7]
        %563 = vrot.lane.b32.xlu0 %v551, 112
        %v564 = vpop.permute.xlu0 %563
        %v565 = vrot.slane %v564, 1
        %vm566 = vcmask 916480
        %v567 = vsel %vm566, %v564, %v565
        %v569 = vadd.f32 %v549, %v567
        %571 = vrot.lane.b32.xlu0 %v555, 112
        %v572 = vpop.permute.xlu0 %571
        %v573 = vrot.slane %v572, 1
        %v574 = vsel %vm566, %v572, %v573
        %v576 = vadd.f32 %v553, %v574
        %578 = vrot.lane.b32.xlu0 %v559, 112
        %v579 = vpop.permute.xlu0 %578
        %v580 = vrot.slane %v579, 1
        %v581 = vsel %vm566, %v579, %v580
        %v583 = vadd.f32 %v557, %v581
        %585 = vrot.lane.b32.xlu0 %v576, 96
        %v586 = vpop.permute.xlu0 %585
        %v587 = vrot.slane %v586, 1
        %vm588 = vcmask 785408
        %v589 = vsel %vm588, %v586, %v587
        %v591 = vadd.f32 %v569, %v589
        %593 = vrot.lane.b32.xlu0 %v561, 96
        %v594 = vpop.permute.xlu0 %593
        %v595 = vrot.slane %v594, 1
        %v596 = vsel %vm588, %v594, %v595
        %v598 = vadd.f32 %v583, %v596
        %600 = vrot.lane.b32.xlu0 %v598, 64
        %v601 = vpop.permute.xlu0 %600
        %v602 = vrot.slane %v601, 7
        %vm603 = vcmask 523264
        %v604 = vsel %vm603, %v602, %v601
        %v606 = vadd.f32 %v591, %v604
        %v608 = vperm.slane %v606, 0
        %v609 = vperm.slane %v606, 1
        %v610 = vperm.slane %v606, 2
        %611 = vrot.lane.b32.xlu0 %v608, 51
        %v612 = vpop.permute.xlu0 %611
        %613 = vrot.lane.b32.xlu0 %v609, 51
        %v614 = vpop.permute.xlu0 %613
        %615 = vrot.lane.b32.xlu0 %v610, 51
        %v616 = vpop.permute.xlu0 %615
        %vm617 = vcmask 416768
        %v618 = vsel %vm617, %v612, %v614
        %v619 = vsel %vm617, %v614, %v616
        %v622 = vsel %vm547, %v618, 0.0
        %v623 = vsel %vm548, %v619, 0.0
        %v624 = vadd.s32 %v539, 4294967294
        %v625 = vadd.s32 %v540, 4294967294
        %vm626 = vcmp.ge.s32.totalorder %v624, 0
        %vm627 = vcmp.ge.s32.totalorder %v625, 0
        %vm628 = vcmp.lt.s32.totalorder %v624, 16
        %vm629 = vcmp.lt.s32.totalorder %v625, 16
        %vm630 = vmand %vm626, %vm628
        %vm631 = vmand %vm627, %vm629
        %s632 = scalar_lea.vmem [#allocation2], 1
        %v633 = vld [vmem:[%s632] ss:$8 sm:$0x7]
        %s634 = scalar_lea.vmem [#allocation2], 32
        %v635 = vld [vmem:[%s634] ss:$8 sm:$0x7]
        %s636 = scalar_lea.vmem [#allocation2], 39
        %v637 = vld [vmem:[%s636] ss:$8 sm:$0x7]
        %s638 = scalar_lea.vmem [#allocation2], 70
        %v639 = vld [vmem:[%s638] ss:$8 sm:$0x7]
        %s640 = scalar_lea.vmem [#allocation2], 109
        %v641 = vld [vmem:[%s640] ss:$8 sm:$0x7]
        %s642 = scalar_lea.vmem [#allocation2], 140
        %v643 = vld [vmem:[%s642] ss:$8 sm:$0x7]
        %s644 = scalar_lea.vmem [#allocation2], 171
        %v645 = vld [vmem:[%s644] ss:$8 sm:$0x7]
        %647 = vrot.lane.b32.xlu0 %v635, 112
        %v648 = vpop.permute.xlu0 %647
        %v649 = vrot.slane %v648, 1
        %v650 = vsel %vm566, %v648, %v649
        %v652 = vadd.f32 %v633, %v650
        %654 = vrot.lane.b32.xlu0 %v639, 112
        %v655 = vpop.permute.xlu0 %654
        %v656 = vrot.slane %v655, 1
        %v657 = vsel %vm566, %v655, %v656
        %v659 = vadd.f32 %v637, %v657
        %661 = vrot.lane.b32.xlu0 %v643, 112
        %v662 = vpop.permute.xlu0 %661
        %v663 = vrot.slane %v662, 1
        %v664 = vsel %vm566, %v662, %v663
        %v666 = vadd.f32 %v641, %v664
        %668 = vrot.lane.b32.xlu0 %v659, 96
        %v669 = vpop.permute.xlu0 %668
        %v670 = vrot.slane %v669, 1
        %v671 = vsel %vm588, %v669, %v670
        %v673 = vadd.f32 %v652, %v671
        %675 = vrot.lane.b32.xlu0 %v645, 96
        %v676 = vpop.permute.xlu0 %675
        %v677 = vrot.slane %v676, 1
        %v678 = vsel %vm588, %v676, %v677
        %v680 = vadd.f32 %v666, %v678
        %682 = vrot.lane.b32.xlu0 %v680, 64
        %v683 = vpop.permute.xlu0 %682
        %v684 = vrot.slane %v683, 7
        %v685 = vsel %vm603, %v684, %v683
        %v687 = vadd.f32 %v673, %v685
        %v689 = vperm.slane %v687, 0
        %v690 = vperm.slane %v687, 1
        %v691 = vperm.slane %v687, 2
        %692 = vrot.lane.b32.xlu0 %v689, 50
        %v693 = vpop.permute.xlu0 %692
        %694 = vrot.lane.b32.xlu0 %v690, 50
        %v695 = vpop.permute.xlu0 %694
        %696 = vrot.lane.b32.xlu0 %v691, 50
        %v697 = vpop.permute.xlu0 %696
        %vm698 = vcmask 408576
        %v699 = vsel %vm698, %v693, %v695
        %v700 = vsel %vm698, %v695, %v697
        %v703 = vsel %vm630, %v699, 0.0
        %v704 = vsel %vm631, %v700, 0.0
        %v705 = vadd.s32 %v539, 4294967295
        %v706 = vadd.s32 %v540, 4294967295
        %vm707 = vcmp.ge.s32.totalorder %v705, 0
        %vm708 = vcmp.ge.s32.totalorder %v706, 0
        %vm709 = vcmp.lt.s32.totalorder %v705, 16
        %vm710 = vcmp.lt.s32.totalorder %v706, 16
        %vm711 = vmand %vm707, %vm709
        %vm712 = vmand %vm708, %vm710
        %s713 = scalar_lea.vmem [#allocation2], 2
        %v714 = vld [vmem:[%s713] ss:$8 sm:$0x7]
        %s715 = scalar_lea.vmem [#allocation2], 33
        %v716 = vld [vmem:[%s715] ss:$8 sm:$0x7]
        %s717 = scalar_lea.vmem [#allocation2], 64
        %v718 = vld [vmem:[%s717] ss:$8 sm:$0x7]
        %s719 = scalar_lea.vmem [#allocation2], 71
        %v720 = vld [vmem:[%s719] ss:$8 sm:$0x7]
        %s721 = scalar_lea.vmem [#allocation2], 110
        %v722 = vld [vmem:[%s721] ss:$8 sm:$0x7]
        %s723 = scalar_lea.vmem [#allocation2], 141
        %v724 = vld [vmem:[%s723] ss:$8 sm:$0x7]
        %s725 = scalar_lea.vmem [#allocation2], 172
        %v726 = vld [vmem:[%s725] ss:$8 sm:$0x7]
        %728 = vrot.lane.b32.xlu0 %v716, 112
        %v729 = vpop.permute.xlu0 %728
        %v730 = vrot.slane %v729, 1
        %v731 = vsel %vm566, %v729, %v730
        %v733 = vadd.f32 %v714, %v731
        %735 = vrot.lane.b32.xlu0 %v720, 112
        %v736 = vpop.permute.xlu0 %735
        %v737 = vrot.slane %v736, 1
        %v738 = vsel %vm566, %v736, %v737
        %v740 = vadd.f32 %v718, %v738
        %742 = vrot.lane.b32.xlu0 %v724, 112
        %v743 = vpop.permute.xlu0 %742
        %v744 = vrot.slane %v743, 1
        %v745 = vsel %vm566, %v743, %v744
        %v747 = vadd.f32 %v722, %v745
        %749 = vrot.lane.b32.xlu0 %v740, 96
        %v750 = vpop.permute.xlu0 %749
        %v751 = vrot.slane %v750, 1
        %v752 = vsel %vm588, %v750, %v751
        %v754 = vadd.f32 %v733, %v752
        %756 = vrot.lane.b32.xlu0 %v726, 96
        %v757 = vpop.permute.xlu0 %756
        %v758 = vrot.slane %v757, 1
        %v759 = vsel %vm588, %v757, %v758
        %v761 = vadd.f32 %v747, %v759
        %763 = vrot.lane.b32.xlu0 %v761, 64
        %v764 = vpop.permute.xlu0 %763
        %v765 = vrot.slane %v764, 7
        %v766 = vsel %vm603, %v765, %v764
        %v768 = vadd.f32 %v754, %v766
        %v770 = vperm.slane %v768, 0
        %v771 = vperm.slane %v768, 1
        %v772 = vperm.slane %v768, 2
        %773 = vrot.lane.b32.xlu0 %v770, 49
        %v774 = vpop.permute.xlu0 %773
        %775 = vrot.lane.b32.xlu0 %v771, 49
        %v776 = vpop.permute.xlu0 %775
        %777 = vrot.lane.b32.xlu0 %v772, 49
        %v778 = vpop.permute.xlu0 %777
        %vm779 = vcmask 400384
        %v780 = vsel %vm779, %v774, %v776
        %v781 = vsel %vm779, %v776, %v778
        %v784 = vsel %vm711, %v780, 0.0
        %v785 = vsel %vm712, %v781, 0.0
        %vm786 = vcmp.ge.s32.totalorder %v539, 0
        %vm787 = vcmp.ge.s32.totalorder %v540, 0
        %vm788 = vcmp.lt.s32.totalorder %v539, 16
        %vm789 = vcmp.lt.s32.totalorder %v540, 16
        %vm790 = vmand %vm786, %vm788
        %vm791 = vmand %vm787, %vm789
        %s792 = scalar_lea.vmem [#allocation2], 3
        %v793 = vld [vmem:[%s792] ss:$8 sm:$0x7]
        %s794 = scalar_lea.vmem [#allocation2], 34
        %v795 = vld [vmem:[%s794] ss:$8 sm:$0x7]
        %s796 = scalar_lea.vmem [#allocation2], 65
        %v797 = vld [vmem:[%s796] ss:$8 sm:$0x7]
        %s798 = scalar_lea.vmem [#allocation2], 104
        %v799 = vld [vmem:[%s798] ss:$8 sm:$0x3]
        %s800 = scalar_lea.vmem [#allocation2], 111
        %v801 = vld [vmem:[%s800] ss:$8 sm:$0x7]
        %s802 = scalar_lea.vmem [#allocation2], 142
        %v803 = vld [vmem:[%s802] ss:$8 sm:$0x7]
        %s804 = scalar_lea.vmem [#allocation2], 173
        %v805 = vld [vmem:[%s804] ss:$8 sm:$0x7]
        %807 = vrot.lane.b32.xlu0 %v795, 112
        %v808 = vpop.permute.xlu0 %807
        %v809 = vrot.slane %v808, 1
        %v810 = vsel %vm566, %v808, %v809
        %v812 = vadd.f32 %v793, %v810
        %814 = vrot.lane.b32.xlu0 %v799, 112
        %v815 = vpop.permute.xlu0 %814
        %v816 = vrot.slane %v815, 7
        %v817 = vsel %vm566, %v816, %v815
        %v819 = vadd.f32 %v797, %v817
        %821 = vrot.lane.b32.xlu0 %v803, 112
        %v822 = vpop.permute.xlu0 %821
        %v823 = vrot.slane %v822, 1
        %v824 = vsel %vm566, %v822, %v823
        %v826 = vadd.f32 %v801, %v824
        %828 = vrot.lane.b32.xlu0 %v819, 96
        %v829 = vpop.permute.xlu0 %828
        %v830 = vrot.slane %v829, 1
        %v831 = vsel %vm588, %v829, %v830
        %v833 = vadd.f32 %v812, %v831
        %835 = vrot.lane.b32.xlu0 %v805, 96
        %v836 = vpop.permute.xlu0 %835
        %v837 = vrot.slane %v836, 1
        %v838 = vsel %vm588, %v836, %v837
        %v840 = vadd.f32 %v826, %v838
        %842 = vrot.lane.b32.xlu0 %v840, 64
        %v843 = vpop.permute.xlu0 %842
        %v844 = vrot.slane %v843, 7
        %v845 = vsel %vm603, %v844, %v843
        %v847 = vadd.f32 %v833, %v845
        %v849 = vperm.slane %v847, 0
        %v850 = vperm.slane %v847, 1
        %v851 = vperm.slane %v847, 2
        %852 = vrot.lane.b32.xlu0 %v849, 48
        %v853 = vpop.permute.xlu0 %852
        %854 = vrot.lane.b32.xlu0 %v850, 48
        %v855 = vpop.permute.xlu0 %854
        %856 = vrot.lane.b32.xlu0 %v851, 48
        %v857 = vpop.permute.xlu0 %856
        %vm858 = vcmask 392192
        %v859 = vsel %vm858, %v853, %v855
        %v860 = vsel %vm858, %v855, %v857
        %v863 = vsel %vm790, %v859, 0.0
        %v864 = vsel %vm791, %v860, 0.0
        %v865 = vadd.s32 %v539, 1
        %v866 = vadd.s32 %v540, 1
        %vm867 = vcmp.ge.s32.totalorder %v865, 0
        %vm868 = vcmp.ge.s32.totalorder %v866, 0
        %vm869 = vcmp.lt.s32.totalorder %v865, 16
        %vm870 = vcmp.lt.s32.totalorder %v866, 16
        %vm871 = vmand %vm867, %vm869
        %vm872 = vmand %vm868, %vm870
        %s873 = scalar_lea.vmem [#allocation2], 4
        %v874 = vld [vmem:[%s873] ss:$8 sm:$0x7]
        %s875 = scalar_lea.vmem [#allocation2], 35
        %v876 = vld [vmem:[%s875] ss:$8 sm:$0x7]
        %s877 = scalar_lea.vmem [#allocation2], 66
        %v878 = vld [vmem:[%s877] ss:$8 sm:$0x7]
        %s879 = scalar_lea.vmem [#allocation2], 105
        %v880 = vld [vmem:[%s879] ss:$8 sm:$0x7]
        %s881 = scalar_lea.vmem [#allocation2], 136
        %v882 = vld [vmem:[%s881] ss:$8 sm:$0x7]
        %s883 = scalar_lea.vmem [#allocation2], 143
        %v884 = vld [vmem:[%s883] ss:$8 sm:$0x7]
        %s885 = scalar_lea.vmem [#allocation2], 174
        %v886 = vld [vmem:[%s885] ss:$8 sm:$0x7]
        %888 = vrot.lane.b32.xlu0 %v876, 112
        %v889 = vpop.permute.xlu0 %888
        %v890 = vrot.slane %v889, 1
        %v891 = vsel %vm566, %v889, %v890
        %v893 = vadd.f32 %v874, %v891
        %895 = vrot.lane.b32.xlu0 %v880, 112
        %v896 = vpop.permute.xlu0 %895
        %v897 = vrot.slane %v896, 7
        %v898 = vsel %vm566, %v897, %v896
        %v900 = vadd.f32 %v878, %v898
        %902 = vrot.lane.b32.xlu0 %v884, 112
        %v903 = vpop.permute.xlu0 %902
        %v904 = vrot.slane %v903, 1
        %v905 = vsel %vm566, %v903, %v904
        %v907 = vadd.f32 %v882, %v905
        %909 = vrot.lane.b32.xlu0 %v900, 96
        %v910 = vpop.permute.xlu0 %909
        %v911 = vrot.slane %v910, 1
        %v912 = vsel %vm588, %v910, %v911
        %v914 = vadd.f32 %v893, %v912
        %916 = vrot.lane.b32.xlu0 %v886, 96
        %v917 = vpop.permute.xlu0 %916
        %v918 = vrot.slane %v917, 1
        %v919 = vsel %vm588, %v917, %v918
        %v921 = vadd.f32 %v907, %v919
        %923 = vrot.lane.b32.xlu0 %v921, 64
        %v924 = vpop.permute.xlu0 %923
        %v925 = vrot.slane %v924, 7
        %v926 = vsel %vm603, %v925, %v924
        %v928 = vadd.f32 %v914, %v926
        %v930 = vperm.slane %v928, 0
        %v931 = vperm.slane %v928, 1
        %v932 = vperm.slane %v928, 2
        %933 = vrot.lane.b32.xlu0 %v930, 47
        %v934 = vpop.permute.xlu0 %933
        %935 = vrot.lane.b32.xlu0 %v931, 47
        %v936 = vpop.permute.xlu0 %935
        %937 = vrot.lane.b32.xlu0 %v932, 47
        %v938 = vpop.permute.xlu0 %937
        %vm939 = vcmask 384000
        %v940 = vsel %vm939, %v934, %v936
        %v941 = vsel %vm939, %v936, %v938
        %v944 = vsel %vm871, %v940, 0.0
        %v945 = vsel %vm872, %v941, 0.0
        %v946 = vadd.s32 %v539, 2
        %v947 = vadd.s32 %v540, 2
        %vm948 = vcmp.ge.s32.totalorder %v946, 0
        %vm949 = vcmp.ge.s32.totalorder %v947, 0
        %vm950 = vcmp.lt.s32.totalorder %v946, 16
        %vm951 = vcmp.lt.s32.totalorder %v947, 16
        %vm952 = vmand %vm948, %vm950
        %vm953 = vmand %vm949, %vm951
        %s954 = scalar_lea.vmem [#allocation2], 5
        %v955 = vld [vmem:[%s954] ss:$8 sm:$0x7]
        %s956 = scalar_lea.vmem [#allocation2], 36
        %v957 = vld [vmem:[%s956] ss:$8 sm:$0x7]
        %s958 = scalar_lea.vmem [#allocation2], 67
        %v959 = vld [vmem:[%s958] ss:$8 sm:$0x7]
        %s960 = scalar_lea.vmem [#allocation2], 106
        %v961 = vld [vmem:[%s960] ss:$8 sm:$0x7]
        %s962 = scalar_lea.vmem [#allocation2], 137
        %v963 = vld [vmem:[%s962] ss:$8 sm:$0x7]
        %s964 = scalar_lea.vmem [#allocation2], 168
        %v965 = vld [vmem:[%s964] ss:$8 sm:$0x7]
        %s966 = scalar_lea.vmem [#allocation2], 175
        %v967 = vld [vmem:[%s966] ss:$8 sm:$0x7]
        %969 = vrot.lane.b32.xlu0 %v957, 112
        %v970 = vpop.permute.xlu0 %969
        %v971 = vrot.slane %v970, 1
        %v972 = vsel %vm566, %v970, %v971
        %v974 = vadd.f32 %v955, %v972
        %976 = vrot.lane.b32.xlu0 %v961, 112
        %v977 = vpop.permute.xlu0 %976
        %v978 = vrot.slane %v977, 7
        %v979 = vsel %vm566, %v978, %v977
        %v981 = vadd.f32 %v959, %v979
        %983 = vrot.lane.b32.xlu0 %v965, 112
        %v984 = vpop.permute.xlu0 %983
        %v985 = vrot.slane %v984, 1
        %v986 = vsel %vm566, %v984, %v985
        %v988 = vadd.f32 %v963, %v986
        %990 = vrot.lane.b32.xlu0 %v981, 96
        %v991 = vpop.permute.xlu0 %990
        %v992 = vrot.slane %v991, 1
        %v993 = vsel %vm588, %v991, %v992
        %v995 = vadd.f32 %v974, %v993
        %997 = vrot.lane.b32.xlu0 %v967, 96
        %v998 = vpop.permute.xlu0 %997
        %v999 = vrot.slane %v998, 1
        %v1000 = vsel %vm588, %v998, %v999
        %v1002 = vadd.f32 %v988, %v1000
        %1004 = vrot.lane.b32.xlu0 %v1002, 64
        %v1005 = vpop.permute.xlu0 %1004
        %v1006 = vrot.slane %v1005, 7
        %v1007 = vsel %vm603, %v1006, %v1005
        %v1009 = vadd.f32 %v995, %v1007
        %v1011 = vperm.slane %v1009, 0
        %v1012 = vperm.slane %v1009, 1
        %v1013 = vperm.slane %v1009, 2
        %1014 = vrot.lane.b32.xlu0 %v1011, 46
        %v1015 = vpop.permute.xlu0 %1014
        %1016 = vrot.lane.b32.xlu0 %v1012, 46
        %v1017 = vpop.permute.xlu0 %1016
        %1018 = vrot.lane.b32.xlu0 %v1013, 46
        %v1019 = vpop.permute.xlu0 %1018
        %vm1020 = vcmask 375808
        %v1021 = vsel %vm1020, %v1015, %v1017
        %v1022 = vsel %vm1020, %v1017, %v1019
        %v1025 = vsel %vm952, %v1021, 0.0
        %v1026 = vsel %vm953, %v1022, 0.0
        %v1027 = vadd.s32 %v539, 3
        %v1028 = vadd.s32 %v540, 3
        %vm1029 = vcmp.ge.s32.totalorder %v1027, 0
        %vm1030 = vcmp.ge.s32.totalorder %v1028, 0
        %vm1031 = vcmp.lt.s32.totalorder %v1027, 16
        %vm1032 = vcmp.lt.s32.totalorder %v1028, 16
        %vm1033 = vmand %vm1029, %vm1031
        %vm1034 = vmand %vm1030, %vm1032
        %s1035 = scalar_lea.vmem [#allocation2], 6
        %v1036 = vld [vmem:[%s1035] ss:$8 sm:$0x7]
        %s1037 = scalar_lea.vmem [#allocation2], 37
        %v1038 = vld [vmem:[%s1037] ss:$8 sm:$0x7]
        %s1039 = scalar_lea.vmem [#allocation2], 68
        %v1040 = vld [vmem:[%s1039] ss:$8 sm:$0x7]
        %s1041 = scalar_lea.vmem [#allocation2], 107
        %v1042 = vld [vmem:[%s1041] ss:$8 sm:$0x7]
        %s1043 = scalar_lea.vmem [#allocation2], 138
        %v1044 = vld [vmem:[%s1043] ss:$8 sm:$0x7]
        %s1045 = scalar_lea.vmem [#allocation2], 169
        %v1046 = vld [vmem:[%s1045] ss:$8 sm:$0x7]
        %s1047 = scalar_lea.vmem [#allocation2], 200
        %v1048 = vld [vmem:[%s1047] ss:$8 sm:$0x7]
        %1050 = vrot.lane.b32.xlu0 %v1038, 112
        %v1051 = vpop.permute.xlu0 %1050
        %v1052 = vrot.slane %v1051, 1
        %v1053 = vsel %vm566, %v1051, %v1052
        %v1055 = vadd.f32 %v1036, %v1053
        %1057 = vrot.lane.b32.xlu0 %v1042, 112
        %v1058 = vpop.permute.xlu0 %1057
        %v1059 = vrot.slane %v1058, 7
        %v1060 = vsel %vm566, %v1059, %v1058
        %v1062 = vadd.f32 %v1040, %v1060
        %1064 = vrot.lane.b32.xlu0 %v1046, 112
        %v1065 = vpop.permute.xlu0 %1064
        %v1066 = vrot.slane %v1065, 1
        %v1067 = vsel %vm566, %v1065, %v1066
        %v1069 = vadd.f32 %v1044, %v1067
        %1071 = vrot.lane.b32.xlu0 %v1062, 96
        %v1072 = vpop.permute.xlu0 %1071
        %v1073 = vrot.slane %v1072, 1
        %v1074 = vsel %vm588, %v1072, %v1073
        %v1076 = vadd.f32 %v1055, %v1074
        %1078 = vrot.lane.b32.xlu0 %v1048, 96
        %v1079 = vpop.permute.xlu0 %1078
        %v1080 = vrot.slane %v1079, 1
        %v1081 = vsel %vm588, %v1079, %v1080
        %v1083 = vadd.f32 %v1069, %v1081
        %1085 = vrot.lane.b32.xlu0 %v1083, 64
        %v1086 = vpop.permute.xlu0 %1085
        %v1087 = vrot.slane %v1086, 7
        %v1088 = vsel %vm603, %v1087, %v1086
        %v1090 = vadd.f32 %v1076, %v1088
        %v1092 = vperm.slane %v1090, 0
        %v1093 = vperm.slane %v1090, 1
        %v1094 = vperm.slane %v1090, 2
        %1095 = vrot.lane.b32.xlu0 %v1092, 45
        %v1096 = vpop.permute.xlu0 %1095
        %1097 = vrot.lane.b32.xlu0 %v1093, 45
        %v1098 = vpop.permute.xlu0 %1097
        %1099 = vrot.lane.b32.xlu0 %v1094, 45
        %v1100 = vpop.permute.xlu0 %1099
        %vm1101 = vcmask 367616
        %v1102 = vsel %vm1101, %v1096, %v1098
        %v1103 = vsel %vm1101, %v1098, %v1100
        %v1106 = vsel %vm1033, %v1102, 0.0
        %v1107 = vsel %vm1034, %v1103, 0.0
        %v1108 = vadd.f32 %v622, %v703
        %v1109 = vadd.f32 %v623, %v704
        %v1110 = vadd.f32 %v784, %v863
        %v1111 = vadd.f32 %v785, %v864
        %v1112 = vadd.f32 %v944, %v1025
        %v1113 = vadd.f32 %v945, %v1026
        %v1114 = vadd.f32 %v1108, %v1110
        %v1115 = vadd.f32 %v1109, %v1111
        %v1116 = vadd.f32 %v1112, %v1106
        %v1117 = vadd.f32 %v1113, %v1107
        %v1118 = vadd.f32 %v1114, %v1116
        %v1119 = vadd.f32 %v1115, %v1117
        %s1120 = sld [smem:[#allocation3]]
        %v1121 = vstv %s1120
        %v1122 = vadd.f32 %v1118, %v1121
        %v1123 = vadd.f32 %v1119, %v1121
        %v1124 = vxor.u32 %v1122, 2147483648
        %v1125 = vxor.u32 %v1123, 2147483648
        %v1126 = vmul.f32 %v1124, 1.442695
        %v1127 = vpow.pop %v1126
        %v1128 = vmul.f32 %v1125, 1.442695
        %v1129 = vpow.pop %v1128
        %v1130 = vadd.f32 %v1127, 1.0
        %v1131 = vadd.f32 %v1129, 1.0
        %v1132 = vrcp.pop %v1130
        %v1133 = vmul.f32 %v1130, %v1132
        %v1134 = vsub.f32 1.0, %v1133
        %v1135 = vmul.f32 %v1132, %v1134
        %v1136 = vadd.f32 %v1132, %v1135
        %vm1137 = vweird.f32 %v1130
        %vm1138 = vweird.f32 %v1132
        %vm1139 = vmor %vm1137, %vm1138
        %v1140 = vsel %vm1139, %v1132, %v1136
        %v1141 = vand.u32 2147483647, %v1130
        %vm1142 = vcmp.eq.f32.partialorder %v1141, 8.507059e+37
        %v1143 = vand.u32 %v1130, 2147483648
        %v1144 = vor.u32 1.1754944e-38, %v1143
        %v1145 = vsel %vm1142, %v1144, %v1140
        %v1146 = vmul.f32 1.0, %v1145
        %v1147 = vrcp.pop %v1131
        %v1148 = vmul.f32 %v1131, %v1147
        %v1149 = vsub.f32 1.0, %v1148
        %v1150 = vmul.f32 %v1147, %v1149
        %v1151 = vadd.f32 %v1147, %v1150
        %vm1152 = vweird.f32 %v1131
        %vm1153 = vweird.f32 %v1147
        %vm1154 = vmor %vm1152, %vm1153
        %v1155 = vsel %vm1154, %v1147, %v1151
        %v1156 = vand.u32 2147483647, %v1131
        %vm1157 = vcmp.eq.f32.partialorder %v1156, 8.507059e+37
        %v1158 = vand.u32 %v1131, 2147483648
        %v1159 = vor.u32 1.1754944e-38, %v1158
        %v1160 = vsel %vm1157, %v1159, %v1155
        %v1161 = vmul.f32 1.0, %v1160
        %v1162 = vperm.slane %v1146, 0
        %v1163 = vperm.slane %v1161, 0
        %v1164 = vmul.f32 %v377, %v1162
        %v1165 = vmul.f32 %v378, %v1163
        %v1166 = vmul.f32 %v379, %v1162
        %v1167 = vmul.f32 %v380, %v1163
        %1168 = vst [vmem:[%s272] sm:$0xff] %v1164
        %1169 = vst [vmem:[%s272 + $0x8] sm:$0xff] %v1165
        %1170 = vst [vmem:[%s272 + $0x10] sm:$0xff] %v1166
        %1171 = vst [vmem:[%s272 + $0x18] sm:$0xff] %v1167
        %s1172 = sand.u32 %s182, 1
        %s1173 = scalar_lea.sflag [#allocation5], %s1172
        %s1174 = sand.u32 %s182, 1
        %s1175 = smul.addr %s1174, 32
        %s1176 = scalar_lea.vmem [#allocation4], %s1175
        // Predicated region
        $region49: #{tpu_custom_call.1} parent=47 // pred_check
          %p1177 = pneg %p192
        $region50: #{tpu_custom_call.1} parent=47 // pred_check_branch
          %1179 = sbr.rel (%p1177) target = $region52
        $region51: #{tpu_custom_call.1} parent=47 // pred_region
          %1181 = vsyncadd %s1173, 0
          %s1182 = smul.addr %s22, 4
          %s1183 = smul.addr %s1182, 8
          %s1184 = scalar_lea.hbm %s7, %s1183
          %s1185 = sshll.u32 %s1176, 4
          %s1186 = int_to_ptr.vmem [resolvable:$true] %s1185
          %s1187 = sshll.u32 %s1184, 4
          %s1188 = int_to_ptr.hbm [resolvable:$true] %s1187
          %1193 = dma.vmem_to_hbm [thread:$0]  %s1186, 512, %s1188, %s1173, 256, 256, 16
        $region52: #{tpu_custom_call.1} parent=47 // pred_fallthru
          _
      $region48: #{tpu_custom_call.1} parent=5 // pred_fallthru
        _
      %p1194 = scmp.le.s32.totalorder 2, %s17
      // Predicated region
      $region53: #{tpu_custom_call.1} parent=5 // pred_check
        %p1195 = pneg %p1194
      $region54: #{tpu_custom_call.1} parent=5 // pred_check_branch
        %1197 = sbr.rel (%p1195) target = $region56
      $region55: #{tpu_custom_call.1} parent=5 // pred_region
        %s1198 = ssub.s32 %s17, 2
        // Predicated region
        $region57: #{tpu_custom_call.1} parent=55 // pred_check
          %p1199 = pneg %p198
        $region58: #{tpu_custom_call.1} parent=55 // pred_check_branch
          %1201 = sbr.rel (%p1199) target = $region60
        $region59: #{tpu_custom_call.1} parent=55 // pred_region
          %s1202 = sand.u32 %s183, 1
          %s1203 = scalar_lea.sflag [#allocation5], %s1202
          %s1204 = sand.u32 %s183, 1
          %s1205 = smul.addr %s1204, 32
          %s1206 = scalar_lea.vmem [#allocation4], %s1205
          %1208 = dma.done %s1203, 512
        $region60: #{tpu_custom_call.1} parent=55 // pred_fallthru
          _
      $region56: #{tpu_custom_call.1} parent=5 // pred_fallthru
        _
    $region6: #{tpu_custom_call.1} parent=1 // loop_footer
      %s21 = sadd.s32 1, %s17
    $region7: #{tpu_custom_call.1} parent=1 // loop_footer_branch
      %16 = sbr.rel target = $region3
    $region8: #{tpu_custom_call.1} parent=1 // loop_exit
      _
    %1209 = vsyncpa [#allocation5], 1
    %s1210 = scalar_lea.sflag [#allocation5], 1
    %1211 = vsyncpa %s1210, 1

</llo_original>
